<compile_context>
chip_gen: v5e
topology: v5e:2x2
jax: 0.10.0
libtpu: 0.0.40
codegen_flags: <defaults>
</compile_context>

<pallas_src>
import math
import functools

import jax
import jax.numpy as jnp
from jax.experimental import pallas as pl
from jax.experimental.pallas import tpu as pltpu


# ----------------------------------------------------------------------------
# Fused whole-network kernel.
#   grid = (graph, layer);  graph is "parallel" (megacore on v7x),
#   layer is "arbitrary" (sequential dependence through the resident output).
#   o_ref block index is constant across the layer axis -> h stays in VMEM.
# ----------------------------------------------------------------------------
def _fused_gcnii_kernel(scal_ref, x_ref, adj_ref, fc0w_ref, fc0b_ref,
                        convw_ref, o_ref, h0_ref, *, variant):
    l = pl.program_id(1)

    # Layer 0: fc0 + ReLU -> h0 (scratch) and the initial h (output block).
    @pl.when(l == 0)
    def _():
        h0 = jnp.maximum(
            jnp.dot(x_ref[0], fc0w_ref[...],
                    preferred_element_type=jnp.float32) + fc0b_ref[...],
            0.0)
        h0_ref[...] = h0
        o_ref[0] = h0

    theta = scal_ref[2 * l]          # per-layer scalars from SMEM
    alpha = scal_ref[2 * l + 1]

    h = o_ref[0]                     # current layer input (f32, VMEM resident)
    h0 = h0_ref[...]                 # f32

    # hi = adj @ h   (bf16 MXU operands, f32 accumulate; cast is VMEM-local)
    hi = jnp.dot(adj_ref[0], h.astype(jnp.bfloat16),
                 preferred_element_type=jnp.float32)

    w = convw_ref[0]                 # (in_feat, nh) bf16 for this layer
    if variant:
        # Fused single K=2*nh matmul: cat([hi, h0]) @ vstack(W1, W2)
        support = jnp.concatenate(
            [hi.astype(jnp.bfloat16), h0.astype(jnp.bfloat16)], axis=-1)
        r = (1.0 - alpha) * hi + alpha * h0
        out = (theta * jnp.dot(support, w, preferred_element_type=jnp.float32)
               + (1.0 - theta) * r + h)
    else:
        support = (1.0 - alpha) * hi + alpha * h0
        out = (theta * jnp.dot(support.astype(jnp.bfloat16), w,
                               preferred_element_type=jnp.float32)
               + (1.0 - theta) * support + h)
    o_ref[0] = jnp.maximum(out, 0.0)          # residual + outer ReLU fused


def _run_fused(scal, x2_bf, adj2_bf, fc0w_bf, fc0b, convw_bf, *, variant,
               n_pad, nfeat, nh, in_feat, nlayers):
    kern = functools.partial(_fused_gcnii_kernel, variant=bool(variant))
    return pl.pallas_call(
        kern,
        out_shape=jax.ShapeDtypeStruct((2, n_pad, nh), jnp.float32),
        grid_spec=pltpu.PrefetchScalarGridSpec(
            num_scalar_prefetch=0,
            grid=(2, nlayers),                               # (graph, layer)
            in_specs=[
                pl.BlockSpec(memory_space=pltpu.MemorySpace.SMEM),       # theta/alpha
                pl.BlockSpec((1, n_pad, nfeat), lambda g, l: (g, 0, 0)), # x (bf16)
                pl.BlockSpec((1, n_pad, n_pad), lambda g, l: (g, 0, 0)), # adj (bf16)
                pl.BlockSpec((nfeat, nh), lambda g, l: (0, 0)),          # fc0 W (bf16)
                pl.BlockSpec((1, nh), lambda g, l: (0, 0)),              # fc0 b (f32)
                pl.BlockSpec((1, in_feat, nh), lambda g, l: (l, 0, 0)),  # layer W (bf16)
            ],
            out_specs=pl.BlockSpec((1, n_pad, nh), lambda g, l: (g, 0, 0)),
            scratch_shapes=[pltpu.VMEM((n_pad, nh), jnp.float32)],       # h0
        ),
        compiler_params=pltpu.CompilerParams(
            dimension_semantics=("parallel", "arbitrary"),
            vmem_limit_bytes=48 * 1024 * 1024),
    )(scal, x2_bf, adj2_bf, fc0w_bf, fc0b, convw_bf)


def _fused_vmem_bytes(n_pad, nfeat, nh, in_feat):
    """Rough per-graph VMEM estimate for the fused kernel (with headroom)."""
    nf = max(nfeat, 128)
    b = 0
    b += 2 * n_pad * n_pad * 2            # adj (bf16, double-buffered)
    b += 2 * n_pad * nf * 2               # x   (bf16, double-buffered)
    b += 2 * n_pad * nh * 4               # resident output h (f32, 2 buffers)
    b += n_pad * nh * 4                   # h0 scratch (f32)
    b += 6 * n_pad * nh * 4               # epilogue temporaries (hi/support/blends)
    b += 2 * (nf + in_feat + 8) * nh * 4  # weight / bias buffers (over-estimate)
    return b


_FUSED_VMEM_BUDGET = 36 * 1024 * 1024     # conservative for v7x's 64 MiB/TC


# ----------------------------------------------------------------------------
# Fallback streamed path (large N): per-layer pallas_call, h/h0 in HBM.
# Applies the review's streamed-path items: bf16 H stream for the matmul
# operand (second output), accumulate directly into o_ref, fused variant
# matmul, tile=512.
# ----------------------------------------------------------------------------
def _linear_relu_kernel(x_ref, w_ref, b_ref, o_ref, ob_ref):
    y = jnp.dot(x_ref[0], w_ref[...], preferred_element_type=jnp.float32)
    y = jnp.maximum(y + b_ref[...], 0.0)
    o_ref[0] = y
    ob_ref[0] = y.astype(jnp.bfloat16)


def _linear_relu_stacked(x2, w_bf, b, *, tile):
    g, n_pad, nfeat = x2.shape
    nh = w_bf.shape[1]
    b2 = b.reshape(1, nh).astype(jnp.float32)
    return pl.pallas_call(
        _linear_relu_kernel,
        out_shape=(jax.ShapeDtypeStruct((g, n_pad, nh), jnp.float32),
                   jax.ShapeDtypeStruct((g, n_pad, nh), jnp.bfloat16)),
        grid_spec=pltpu.PrefetchScalarGridSpec(
            num_scalar_prefetch=0,
            grid=(g, n_pad // tile),
            in_specs=[
                pl.BlockSpec((1, tile, nfeat), lambda gi, r: (gi, r, 0)),
                pl.BlockSpec((nfeat, nh), lambda gi, r: (0, 0)),
                pl.BlockSpec((1, nh), lambda gi, r: (0, 0)),
            ],
            out_specs=[pl.BlockSpec((1, tile, nh), lambda gi, r: (gi, r, 0)),
                       pl.BlockSpec((1, tile, nh), lambda gi, r: (gi, r, 0))],
        ),
        compiler_params=pltpu.CompilerParams(
            dimension_semantics=("parallel", "parallel"),
            vmem_limit_bytes=48 * 1024 * 1024),
    )(x2, w_bf, b2)


def _layer_stream_kernel(scal_ref, adj_ref, hkb_ref, hres_ref, h0_ref, w_ref,
                         o_ref, ob_ref, *, variant):
    k = pl.program_id(2)

    @pl.when(k == 0)
    def _():
        o_ref[...] = jnp.zeros(o_ref.shape, o_ref.dtype)

    # Accumulate hi directly into the VMEM-resident f32 output block.
    o_ref[0] += jnp.dot(adj_ref[0], hkb_ref[0],
                        preferred_element_type=jnp.float32)

    @pl.when(k == pl.num_programs(2) - 1)
    def _():
        theta = scal_ref[0]
        alpha = scal_ref[1]
        hi = o_ref[0]
        h0 = h0_ref[0]
        hres = hres_ref[0]
        if variant:
            support = jnp.concatenate(
                [hi.astype(jnp.bfloat16), h0.astype(jnp.bfloat16)], axis=-1)
            r = (1.0 - alpha) * hi + alpha * h0
            out = (theta * jnp.dot(support, w_ref[...],
                                   preferred_element_type=jnp.float32)
                   + (1.0 - theta) * r + hres)
        else:
            support = (1.0 - alpha) * hi + alpha * h0
            out = (theta * jnp.dot(support.astype(jnp.bfloat16), w_ref[...],
                                   preferred_element_type=jnp.float32)
                   + (1.0 - theta) * support + hres)
        out = jnp.maximum(out, 0.0)
        o_ref[0] = out
        ob_ref[0] = out.astype(jnp.bfloat16)


def _make_layer_fn(n_pad, nh, in_feat, variant, tile):
    kern = functools.partial(_layer_stream_kernel, variant=bool(variant))
    nt = n_pad // tile
    # TODO(synk): on v5e, pipeline_mode=pl.Buffered(3) on the adj BlockSpec
    # would further hide the adj DMA under the heavy last-K epilogue.
    return pl.pallas_call(
        kern,
        out_shape=(jax.ShapeDtypeStruct((2, n_pad, nh), jnp.float32),
                   jax.ShapeDtypeStruct((2, n_pad, nh), jnp.bfloat16)),
        grid_spec=pltpu.PrefetchScalarGridSpec(
            num_scalar_prefetch=0,
            grid=(2, nt, nt),                                   # (graph, rows, K)
            in_specs=[
                pl.BlockSpec(memory_space=pltpu.MemorySpace.SMEM),          # [theta, alpha]
                pl.BlockSpec((1, tile, tile), lambda g, r, k: (g, r, k)),   # adj tile
                pl.BlockSpec((1, tile, nh), lambda g, r, k: (g, k, 0)),     # h bf16 K-slice
                pl.BlockSpec((1, tile, nh), lambda g, r, k: (g, r, 0)),     # h f32 residual
                pl.BlockSpec((1, tile, nh), lambda g, r, k: (g, r, 0)),     # h0 f32 rows
                pl.BlockSpec((in_feat, nh), lambda g, r, k: (0, 0)),        # W (bf16)
            ],
            out_specs=[pl.BlockSpec((1, tile, nh), lambda g, r, k: (g, r, 0)),
                       pl.BlockSpec((1, tile, nh), lambda g, r, k: (g, r, 0))],
        ),
        compiler_params=pltpu.CompilerParams(
            dimension_semantics=("parallel", "parallel", "arbitrary"),
            vmem_limit_bytes=48 * 1024 * 1024),
    )


# ----------------------------------------------------------------------------
# Padding helpers (cast first, then zero-pad: half the preamble bytes).
# Padded adj rows/cols are zero so padded rows never mix into real rows.
# ----------------------------------------------------------------------------
def _round_up(n, m):
    return ((n + m - 1) // m) * m


def _pad_cast_rows(a, n_pad, dtype):
    a = a.astype(dtype)
    n = a.shape[0]
    if n != n_pad:
        a = jnp.pad(a, [(0, n_pad - n)] + [(0, 0)] * (a.ndim - 1))
    return a


def _pad_cast_adj(a, n_pad, dtype):
    a = a.astype(dtype)
    n = a.shape[0]
    if n != n_pad:
        a = jnp.pad(a, [(0, n_pad - n), (0, n_pad - n)])
    return a


# ----------------------------------------------------------------------------
# GCNIIppi forward (inference mode)
# ----------------------------------------------------------------------------
def gcnii_ppi_forward(params, x, adj, wild_adj, wild_feature, nodes,
                      mutation_site, aux, *, lamda, alpha, variant, nlayers):
    del nodes  # unused in the reference forward
    n = x.shape[0]
    nfeat = x.shape[1]
    nh = params["fc0_w"].shape[1]
    in_feat = params["conv_w"][0].shape[0]

    fc0w_bf = params["fc0_w"].astype(jnp.bfloat16)
    fc0b = params["fc0_b"].reshape(1, nh).astype(jnp.float32)
    thetas = [math.log(lamda / (i + 1) + 1.0) for i in range(nlayers)]

    n_pad_fused = _round_up(n, 128)
    use_fused = (_fused_vmem_bytes(n_pad_fused, nfeat, nh, in_feat)
                 <= _FUSED_VMEM_BUDGET)

    if use_fused:
        n_pad = n_pad_fused
        x2 = jnp.stack([_pad_cast_rows(x, n_pad, jnp.bfloat16),
                        _pad_cast_rows(wild_feature, n_pad, jnp.bfloat16)])
        adj2 = jnp.stack([_pad_cast_adj(adj, n_pad, jnp.bfloat16),
                          _pad_cast_adj(wild_adj, n_pad, jnp.bfloat16)])
        # [theta_0, alpha, theta_1, alpha, ...] as one flat SMEM vector.
        scal = jnp.array([v for t in thetas for v in (t, alpha)],
                         dtype=jnp.float32)
        convw = jnp.stack(params["conv_w"]).astype(jnp.bfloat16)
        h = _run_fused(scal, x2, adj2, fc0w_bf, fc0b, convw,
                       variant=variant, n_pad=n_pad, nfeat=nfeat, nh=nh,
                       in_feat=in_feat, nlayers=nlayers)
    else:
        # Large graphs: stream adj / h per layer, h & matmul operand as bf16.
        tile = 512
        n_pad = _round_up(n, tile)
        x2 = jnp.stack([_pad_cast_rows(x, n_pad, jnp.bfloat16),
                        _pad_cast_rows(wild_feature, n_pad, jnp.bfloat16)])
        adj2 = jnp.stack([_pad_cast_adj(adj, n_pad, jnp.bfloat16),
                          _pad_cast_adj(wild_adj, n_pad, jnp.bfloat16)])
        h_f32, h_bf = _linear_relu_stacked(x2, fc0w_bf, params["fc0_b"],
                                           tile=tile)
        h0_f32 = h_f32
        layer_fn = _make_layer_fn(n_pad, nh, in_feat, variant, tile)
        for i in range(nlayers):
            scal = jnp.array([thetas[i], alpha], dtype=jnp.float32)
            w = params["conv_w"][i].astype(jnp.bfloat16)
            h_f32, h_bf = layer_fn(scal, adj2, h_bf, h_f32, h0_f32, w)
        h = h_f32

    # ---- tiny 1-D tail: plain JAX glue ----
    li = h[0, :n]
    wli = h[1, :n]
    li_m = jnp.take(li, mutation_site, axis=0)
    wli_m = jnp.take(wli, mutation_site, axis=0)
    differ_sum = jnp.sum(li_m, axis=0) - jnp.sum(wli_m, axis=0)   # (nhidden,)
    # (reference also builds differ_mean / a cat, then overwrites it)
    aux_f = aux.astype(jnp.float32)[-4:]
    hidden = differ_sum @ params["fc_w"] + params["fc_b"]         # (nhidden//32,)
    hidden = jnp.maximum(hidden, 0.0)
    out_vec = jnp.concatenate([hidden, aux_f], axis=0)            # (nhidden//32+4,)
    output = out_vec @ params["fc2_w"] + params["fc2_b"]          # (1,)
    return output


# ----------------------------------------------------------------------------
# Deterministic parameter init (shapes match the PyTorch module __init__)
# ----------------------------------------------------------------------------
def init_params(key, nfeat, nhidden, nlayers, variant):
    ks = jax.random.split(key, 4 + nlayers)
    p = {}
    s0 = 1.0 / math.sqrt(nfeat)
    p["fc0_w"] = jax.random.uniform(ks[0], (nfeat, nhidden), jnp.float32, -s0, s0)
    p["fc0_b"] = jax.random.uniform(ks[1], (nhidden,), jnp.float32, -s0, s0)
    conv_in = 2 * nhidden if variant else nhidden
    sc = 1.0 / math.sqrt(nhidden)
    p["conv_w"] = [
        jax.random.uniform(ks[4 + i], (conv_in, nhidden), jnp.float32, -sc, sc)
        for i in range(nlayers)
    ]
    nsmall = nhidden // 32
    sf = 1.0 / math.sqrt(nhidden)
    p["fc_w"] = jax.random.uniform(ks[2], (nhidden, nsmall), jnp.float32, -sf, sf)
    p["fc_b"] = jnp.zeros((nsmall,), jnp.float32)
    s2 = 1.0 / math.sqrt(nsmall + 4)
    p["fc2_w"] = jax.random.uniform(ks[3], (nsmall + 4, 1), jnp.float32, -s2, s2)
    p["fc2_b"] = jnp.zeros((1,), jnp.float32)
    # fc_aux / fc_cross are never used in the reference forward -> omitted.
    return p


if __name__ == "__main__":
    NODES = 256
    NFEAT = 64
    NHIDDEN = 128
    NLAYERS = 2
    LAMDA = 0.5
    ALPHA = 0.1
    VARIANT = False

    key = jax.random.PRNGKey(0)
    k_par, k_x, k_wx, k_adj, k_wadj, k_aux = jax.random.split(key, 6)

    params = init_params(k_par, NFEAT, NHIDDEN, NLAYERS, VARIANT)

    x = jax.random.normal(k_x, (NODES, NFEAT), jnp.float32)
    wild_feature = jax.random.normal(k_wx, (NODES, NFEAT), jnp.float32)
    adj = jax.random.uniform(k_adj, (NODES, NODES), jnp.float32) / NODES
    wild_adj = jax.random.uniform(k_wadj, (NODES, NODES), jnp.float32) / NODES
    nodes = jnp.int32(NODES)
    mutation_site = jnp.array([3, 17, 42, 100, 200], dtype=jnp.int32)
    aux = jax.random.normal(k_aux, (30,), jnp.float32)

    fwd = jax.jit(functools.partial(
        gcnii_ppi_forward, lamda=LAMDA, alpha=ALPHA, variant=VARIANT,
        nlayers=NLAYERS))
    out = fwd(params, x, adj, wild_adj, wild_feature, nodes, mutation_site, aux)
    out = jax.block_until_ready(out)
    assert out.shape == (1,)
    print("KERNEL_OK")
</pallas_src>

<mosaic_0001>
module attributes {stable_mosaic.version = 11 : i64} {
  func.func @_fused_gcnii_kernel(%arg0: i32, %arg1: i32, %arg2: memref<4xf32, #tpu.memory_space<smem>>, %arg3: memref<1x256x64xbf16, #tpu.memory_space<vmem>>, %arg4: memref<1x256x256xbf16, #tpu.memory_space<vmem>>, %arg5: memref<64x128xbf16, #tpu.memory_space<vmem>>, %arg6: memref<1x128xf32, #tpu.memory_space<vmem>>, %arg7: memref<1x128x128xbf16, #tpu.memory_space<vmem>>, %arg8: memref<1x256x128xf32, #tpu.memory_space<vmem>>, %arg9: memref<256x128xf32, #tpu.memory_space<vmem>>) attributes {dimension_semantics = [#tpu.dimension_semantics<parallel>, #tpu.dimension_semantics<arbitrary>], iteration_bounds = array<i64: 2, 2>, scalar_prefetch = 0 : i64, scratch_operands = 1 : i64, tpu.core_type = #tpu.core_type<tc>, window_params = [{transform_indices = @transform_0, window_bounds = array<i64: 4>}, {transform_indices = @transform_1, window_bounds = array<i64: 1, 256, 64>}, {transform_indices = @transform_2, window_bounds = array<i64: 1, 256, 256>}, {pipeline_mode = #tpu.pipeline_mode<synchronous>, transform_indices = @transform_3, window_bounds = array<i64: 64, 128>}, {pipeline_mode = #tpu.pipeline_mode<synchronous>, transform_indices = @transform_4, window_bounds = array<i64: 1, 128>}, {transform_indices = @transform_5, window_bounds = array<i64: 1, 128, 128>}, {transform_indices = @transform_6, window_bounds = array<i64: 1, 256, 128>}]} {
    %c0_i32 = arith.constant 0 : i32
    %0 = arith.cmpi eq, %arg1, %c0_i32 : i32
    %1 = arith.extui %0 : i1 to i32
    %c0_i32_0 = arith.constant 0 : i32
    %2 = arith.cmpi ne, %1, %c0_i32_0 : i32
    scf.if %2 {
      %c0_19 = arith.constant 0 : index
      %c0_20 = arith.constant 0 : index
      %c0_21 = arith.constant 0 : index
      %39 = vector.load %arg3[%c0_19, %c0_20, %c0_21] : memref<1x256x64xbf16, #tpu.memory_space<vmem>>, vector<1x256x64xbf16>
      %40 = vector.shape_cast %39 : vector<1x256x64xbf16> to vector<256x64xbf16>
      %c0_22 = arith.constant 0 : index
      %c0_23 = arith.constant 0 : index
      %41 = vector.load %arg5[%c0_22, %c0_23] : memref<64x128xbf16, #tpu.memory_space<vmem>>, vector<64x128xbf16>
      %cst_24 = arith.constant dense<0.000000e+00> : vector<256x128xf32>
      %42 = tpu.matmul %40, %41, %cst_24 {dimension_numbers = #tpu.dot_dimension_numbers<[1], [0], [0], [1], [0, 0, 1, 1], [], []>} : vector<256x64xbf16>, vector<64x128xbf16>, vector<256x128xf32> -> vector<256x128xf32>
      %c0_25 = arith.constant 0 : index
      %c0_26 = arith.constant 0 : index
      %43 = vector.load %arg6[%c0_25, %c0_26] : memref<1x128xf32, #tpu.memory_space<vmem>>, vector<1x128xf32>
      %44 = vector.broadcast %43 : vector<1x128xf32> to vector<256x128xf32>
      %45 = arith.addf %42, %44 : vector<256x128xf32>
      %cst_27 = arith.constant 0.000000e+00 : f32
      %46 = vector.broadcast %cst_27 : f32 to vector<256x128xf32>
      %47 = arith.maximumf %45, %46 : vector<256x128xf32>
      %c0_28 = arith.constant 0 : index
      %c0_29 = arith.constant 0 : index
      %48 = vector.load %arg9[%c0_28, %c0_29] : memref<256x128xf32, #tpu.memory_space<vmem>>, vector<256x128xf32>
      tpu.vector_store %arg9[%c0_28, %c0_29], %47 {strides = array<i32>} : memref<256x128xf32, #tpu.memory_space<vmem>>, vector<256x128xf32>,
      %c0_30 = arith.constant 0 : index
      %c0_31 = arith.constant 0 : index
      %c0_32 = arith.constant 0 : index
      %49 = vector.load %arg8[%c0_30, %c0_31, %c0_32] : memref<1x256x128xf32, #tpu.memory_space<vmem>>, vector<1x256x128xf32>
      %50 = vector.shape_cast %49 : vector<1x256x128xf32> to vector<256x128xf32>
      %51 = vector.shape_cast %47 : vector<256x128xf32> to vector<1x256x128xf32>
      tpu.vector_store %arg8[%c0_30, %c0_31, %c0_32], %51 {strides = array<i32>} : memref<1x256x128xf32, #tpu.memory_space<vmem>>, vector<1x256x128xf32>,
    } else {
    }
    %c2_i32 = arith.constant 2 : i32
    %3 = arith.muli %c2_i32, %arg1 : i32
    %4 = arith.index_cast %3 : i32 to index
    %5 = memref.load %arg2[%4] : memref<4xf32, #tpu.memory_space<smem>>
    %c2_i32_1 = arith.constant 2 : i32
    %6 = arith.muli %c2_i32_1, %arg1 : i32
    %c1_i32 = arith.constant 1 : i32
    %7 = arith.addi %6, %c1_i32 : i32
    %8 = arith.index_cast %7 : i32 to index
    %9 = memref.load %arg2[%8] : memref<4xf32, #tpu.memory_space<smem>>
    %c0 = arith.constant 0 : index
    %c0_2 = arith.constant 0 : index
    %c0_3 = arith.constant 0 : index
    %10 = vector.load %arg8[%c0, %c0_2, %c0_3] : memref<1x256x128xf32, #tpu.memory_space<vmem>>, vector<1x256x128xf32>
    %11 = vector.shape_cast %10 : vector<1x256x128xf32> to vector<256x128xf32>
    %c0_4 = arith.constant 0 : index
    %c0_5 = arith.constant 0 : index
    %12 = vector.load %arg9[%c0_4, %c0_5] : memref<256x128xf32, #tpu.memory_space<vmem>>, vector<256x128xf32>
    %c0_6 = arith.constant 0 : index
    %c0_7 = arith.constant 0 : index
    %c0_8 = arith.constant 0 : index
    %13 = vector.load %arg4[%c0_6, %c0_7, %c0_8] : memref<1x256x256xbf16, #tpu.memory_space<vmem>>, vector<1x256x256xbf16>
    %14 = vector.shape_cast %13 : vector<1x256x256xbf16> to vector<256x256xbf16>
    %15 = arith.truncf %11 : vector<256x128xf32> to vector<256x128xbf16>
    %cst = arith.constant dense<0.000000e+00> : vector<256x128xf32>
    %16 = tpu.matmul %14, %15, %cst {dimension_numbers = #tpu.dot_dimension_numbers<[1], [0], [0], [1], [0, 0, 1, 1], [], []>} : vector<256x256xbf16>, vector<256x128xbf16>, vector<256x128xf32> -> vector<256x128xf32>
    %c0_9 = arith.constant 0 : index
    %c0_10 = arith.constant 0 : index
    %c0_11 = arith.constant 0 : index
    %17 = vector.load %arg7[%c0_9, %c0_10, %c0_11] : memref<1x128x128xbf16, #tpu.memory_space<vmem>>, vector<1x128x128xbf16>
    %18 = vector.shape_cast %17 : vector<1x128x128xbf16> to vector<128x128xbf16>
    %cst_12 = arith.constant 1.000000e+00 : f32
    %19 = arith.subf %cst_12, %9 : f32
    %20 = vector.broadcast %19 : f32 to vector<256x128xf32>
    %21 = arith.mulf %20, %16 : vector<256x128xf32>
    %22 = vector.broadcast %9 : f32 to vector<256x128xf32>
    %23 = arith.mulf %22, %12 : vector<256x128xf32>
    %24 = arith.addf %21, %23 : vector<256x128xf32>
    %25 = arith.truncf %24 : vector<256x128xf32> to vector<256x128xbf16>
    %cst_13 = arith.constant dense<0.000000e+00> : vector<256x128xf32>
    %26 = tpu.matmul %25, %18, %cst_13 {dimension_numbers = #tpu.dot_dimension_numbers<[1], [0], [0], [1], [0, 0, 1, 1], [], []>} : vector<256x128xbf16>, vector<128x128xbf16>, vector<256x128xf32> -> vector<256x128xf32>
    %27 = vector.broadcast %5 : f32 to vector<256x128xf32>
    %28 = arith.mulf %27, %26 : vector<256x128xf32>
    %cst_14 = arith.constant 1.000000e+00 : f32
    %29 = arith.subf %cst_14, %5 : f32
    %30 = vector.broadcast %29 : f32 to vector<256x128xf32>
    %31 = arith.mulf %30, %24 : vector<256x128xf32>
    %32 = arith.addf %28, %31 : vector<256x128xf32>
    %33 = arith.addf %32, %11 : vector<256x128xf32>
    %cst_15 = arith.constant 0.000000e+00 : f32
    %34 = vector.broadcast %cst_15 : f32 to vector<256x128xf32>
    %35 = arith.maximumf %33, %34 : vector<256x128xf32>
    %c0_16 = arith.constant 0 : index
    %c0_17 = arith.constant 0 : index
    %c0_18 = arith.constant 0 : index
    %36 = vector.load %arg8[%c0_16, %c0_17, %c0_18] : memref<1x256x128xf32, #tpu.memory_space<vmem>>, vector<1x256x128xf32>
    %37 = vector.shape_cast %36 : vector<1x256x128xf32> to vector<256x128xf32>
    %38 = vector.shape_cast %35 : vector<256x128xf32> to vector<1x256x128xf32>
    tpu.vector_store %arg8[%c0_16, %c0_17, %c0_18], %38 {strides = array<i32>} : memref<1x256x128xf32, #tpu.memory_space<vmem>>, vector<1x256x128xf32>,
    return
  }
  func.func @transform_0(%arg0: i32, %arg1: i32) -> i32 {
    %c0_i32 = arith.constant 0 : i32
    %c0_i32_0 = arith.constant 0 : i32
    return %c0_i32 : i32
  }
  func.func @transform_1(%arg0: i32, %arg1: i32) -> (i32, i32, i32) {
    %c0_i32 = arith.constant 0 : i32
    %c0_i32_0 = arith.constant 0 : i32
    %c0_i32_1 = arith.constant 0 : i32
    return %arg0, %c0_i32, %c0_i32_0 : i32, i32, i32
  }
  func.func @transform_2(%arg0: i32, %arg1: i32) -> (i32, i32, i32) {
    %c0_i32 = arith.constant 0 : i32
    %c0_i32_0 = arith.constant 0 : i32
    %c0_i32_1 = arith.constant 0 : i32
    return %arg0, %c0_i32, %c0_i32_0 : i32, i32, i32
  }
  func.func @transform_3(%arg0: i32, %arg1: i32) -> (i32, i32) {
    %c0_i32 = arith.constant 0 : i32
    %c0_i32_0 = arith.constant 0 : i32
    %c0_i32_1 = arith.constant 0 : i32
    return %c0_i32, %c0_i32_0 : i32, i32
  }
  func.func @transform_4(%arg0: i32, %arg1: i32) -> (i32, i32) {
    %c0_i32 = arith.constant 0 : i32
    %c0_i32_0 = arith.constant 0 : i32
    %c0_i32_1 = arith.constant 0 : i32
    return %c0_i32, %c0_i32_0 : i32, i32
  }
  func.func @transform_5(%arg0: i32, %arg1: i32) -> (i32, i32, i32) {
    %c0_i32 = arith.constant 0 : i32
    %c0_i32_0 = arith.constant 0 : i32
    %c0_i32_1 = arith.constant 0 : i32
    return %arg1, %c0_i32, %c0_i32_0 : i32, i32, i32
  }
  func.func @transform_6(%arg0: i32, %arg1: i32) -> (i32, i32, i32) {
    %c0_i32 = arith.constant 0 : i32
    %c0_i32_0 = arith.constant 0 : i32
    %c0_i32_1 = arith.constant 0 : i32
    return %arg0, %c0_i32, %c0_i32_0 : i32, i32, i32
  }
}

</mosaic_0001>

<llo_original>
// kernel: sub.1
$region0: #{sub.1}
  #allocation0 [shape = 's32[1]{0}', space=sflag, size = 0x4, scoped, tag = 'scoped memory for sub.1']
  %s0 = inlined_call_operand.vmem [shape: f32[128], index: 0, kind: input, shape index: {}]
  %s1 = inlined_call_operand.vmem [shape: f32[128], index: 1, kind: input, shape index: {}]
  %s2 = inlined_call_operand.vmem [shape: f32[128], index: 2, kind: output, shape index: {}]
  %v3 = vld [vmem:[%s0] sm:$0x1]
  %v4 = vld [vmem:[%s1] sm:$0x1]
  %5 = xla_tuple %v3, %v4
  %6 = xla_tuple %5
  %v7 = vsub.f32 %v3, %v4
  %8 = xla_tuple %v7
  %9 = vst [vmem:[%s2] sm:$0x1] %v7

// kernel: gcnii_ppi_forward.1
$region0: #{gcnii_ppi_forward.1}
  #allocation0 [shape = 'u32[]', space=smem, size = 0x4, offset = 0x4, fixed_abs, tag = 'smem constant byte address 0x4 - core index']
  #allocation1 [shape = 'u32[72,128]{1,0:T(1,128)}', space=vmem, size = 0x9000, scoped, tag = 'internal scratch']
  #allocation2 [shape = 'f32[256,128]{1,0:T(8,128)}', space=vmem, size = 0x20000, scoped, tag = 'scratch operand']
  %s0 = inlined_call_operand.vmem [shape: f32[4], index: 0, kind: input, shape index: {}]
  %s1 = inlined_call_operand.vmem [shape: bf16[2,256,64], index: 1, kind: input, shape index: {}]
  %s2 = inlined_call_operand.vmem [shape: bf16[2,256,256], index: 2, kind: input, shape index: {}]
  %s3 = inlined_call_operand.vmem [shape: bf16[64,128], index: 3, kind: input, shape index: {}]
  %s4 = inlined_call_operand.vmem [shape: f32[1,128], index: 4, kind: input, shape index: {}]
  %s5 = inlined_call_operand.vmem [shape: bf16[2,128,128], index: 5, kind: input, shape index: {}]
  %s6 = inlined_call_operand.vmem [shape: f32[2,256,128], index: 6, kind: output, shape index: {}]
  %s7 = sld [smem:[#allocation0]]
  $region65: #{gcnii_ppi_forward.1} parent=0
    _
  %s9 = ssub.s32 1, %s7
  %s10 = scalar_select 0, %s9, %s7
  $region1: #{gcnii_ppi_forward.1} parent=0
    #allocation3 [shape = 'u8[512]{0}', space=smem, size = 0x200, scoped, tag = 'input window, operand 0, single buffered']
    #allocation4 [shape = 's32[2]{0}', space=sflag, size = 0x8, scoped, tag = 'scoped memory for gcnii_ppi_forward.1']
    %11 = vsyncpa [#allocation4], 0
    loop: start=0, step=1, limit=6
    $region2: #{gcnii_ppi_forward.1} parent=1 // loop_pre_header
      _
    $region3: #{gcnii_ppi_forward.1} parent=1 // loop_header
      %s13 = sphi 0, %s17
      %p14 = scmp.ge.s32.totalorder %s13, 6
      %s20 = sphi 0, %s32
      %s21 = sphi 0, %s28
      %s22 = sphi 0, %s20
      %s23 = sphi 0, %s21
      %s24 = sphi 0, %s22
      %s25 = sphi 0, %s23
      %s33 = sphi 0, %s33
      %s35 = sphi 0, %s33
      %s36 = sphi 0, %s35
      %s50 = sphi 0, %s36
      %s56 = sphi 0, %s58
      %s59 = sphi 0, %s56
      %s60 = sphi 0, %s59
      %s76 = sphi 0, %s60
      %s82 = sphi 0, %s84
      %s85 = sphi 0, %s82
      %s86 = sphi 0, %s85
      %s102 = sphi 0, %s86
      %s106 = sphi 0, %s106
      %s108 = sphi 0, %s106
      %s109 = sphi 0, %s108
      %s123 = sphi 0, %s109
      %s127 = sphi 0, %s127
      %s129 = sphi 0, %s127
      %s130 = sphi 0, %s129
      %s144 = sphi 0, %s130
      %s150 = sphi 0, %s152
      %s153 = sphi 0, %s150
      %s154 = sphi 0, %s153
      %s170 = sphi 0, %s154
      %s176 = sphi 0, %s178
      %s179 = sphi 0, %s176
      %s180 = sphi 0, %s179
      %s196 = sphi 0, %s180
    $region4: #{gcnii_ppi_forward.1} parent=1 // loop_header_branch
      %16 = sbr.rel (%p14) target = $region8
    $region5: #{gcnii_ppi_forward.1} parent=1 // loop_body
      %s18 = ssub.s32 %s13, 1
      %s19 = ssub.s32 %s13, 2
      %s26 = sadd.s32 1, %s21
      %p27 = scmp.ge.s32.totalorder %s26, 2
      %s28 = scalar_select %p27, 0, %s26
      %s29 = sadd.s32 1, %s20
      %s30 = scalar_select %p27, %s29, %s20
      %p31 = scmp.ge.s32.totalorder %s30, 2
      %s32 = scalar_select %p31, 0, %s30
      %s34 = sadd.s32 %s33, 1
      %p37 = scmp.eq.s32.totalorder %s13, 3
      %p38 = scmp.ne.s32.totalorder %s33, %s35
      %p39 = scmp.eq.s32.totalorder %s13, 0
      %p40 = por %p38, %p39
      %p41 = scmp.ne.s32.totalorder %s33, %s35
      %p42 = scmp.eq.s32.totalorder %s18, 3
      %p43 = por %p41, %p42
      %p44 = scmp.ne.s32.totalorder %s35, %s36
      %p45 = scmp.eq.s32.totalorder %s18, 0
      %p46 = por %p44, %p45
      %p47 = scmp.ne.s32.totalorder %s35, %s36
      %p48 = scmp.eq.s32.totalorder %s19, 3
      %p49 = por %p47, %p48
      %p51 = scmp.ne.s32.totalorder %s36, %s50
      %p52 = scmp.eq.s32.totalorder %s19, 0
      %p53 = por %p51, %p52
      %s54 = ssub.s32 %s20, %s32
      %p55 = scmp.eq.s32.totalorder %s54, 0
      %s57 = sadd.s32 %s56, 1
      %s58 = scalar_select %p55, %s56, %s57
      %p61 = pneg %p55
      %p62 = scmp.eq.s32.totalorder %s13, 3
      %p63 = por %p61, %p62
      %p64 = scmp.ne.s32.totalorder %s56, %s59
      %p65 = scmp.eq.s32.totalorder %s13, 0
      %p66 = por %p64, %p65
      %p67 = scmp.ne.s32.totalorder %s56, %s59
      %p68 = scmp.eq.s32.totalorder %s18, 3
      %p69 = por %p67, %p68
      %p70 = scmp.ne.s32.totalorder %s59, %s60
      %p71 = scmp.eq.s32.totalorder %s18, 0
      %p72 = por %p70, %p71
      %p73 = scmp.ne.s32.totalorder %s59, %s60
      %p74 = scmp.eq.s32.totalorder %s19, 3
      %p75 = por %p73, %p74
      %p77 = scmp.ne.s32.totalorder %s60, %s76
      %p78 = scmp.eq.s32.totalorder %s19, 0
      %p79 = por %p77, %p78
      %s80 = ssub.s32 %s20, %s32
      %p81 = scmp.eq.s32.totalorder %s80, 0
      %s83 = sadd.s32 %s82, 1
      %s84 = scalar_select %p81, %s82, %s83
      %p87 = pneg %p81
      %p88 = scmp.eq.s32.totalorder %s13, 3
      %p89 = por %p87, %p88
      %p90 = scmp.ne.s32.totalorder %s82, %s85
      %p91 = scmp.eq.s32.totalorder %s13, 0
      %p92 = por %p90, %p91
      %p93 = scmp.ne.s32.totalorder %s82, %s85
      %p94 = scmp.eq.s32.totalorder %s18, 3
      %p95 = por %p93, %p94
      %p96 = scmp.ne.s32.totalorder %s85, %s86
      %p97 = scmp.eq.s32.totalorder %s18, 0
      %p98 = por %p96, %p97
      %p99 = scmp.ne.s32.totalorder %s85, %s86
      %p100 = scmp.eq.s32.totalorder %s19, 3
      %p101 = por %p99, %p100
      %p103 = scmp.ne.s32.totalorder %s86, %s102
      %p104 = scmp.eq.s32.totalorder %s19, 0
      %p105 = por %p103, %p104
      %s107 = sadd.s32 %s106, 1
      %p110 = scmp.eq.s32.totalorder %s13, 3
      %p111 = scmp.ne.s32.totalorder %s106, %s108
      %p112 = scmp.eq.s32.totalorder %s13, 0
      %p113 = por %p111, %p112
      %p114 = scmp.ne.s32.totalorder %s106, %s108
      %p115 = scmp.eq.s32.totalorder %s18, 3
      %p116 = por %p114, %p115
      %p117 = scmp.ne.s32.totalorder %s108, %s109
      %p118 = scmp.eq.s32.totalorder %s18, 0
      %p119 = por %p117, %p118
      %p120 = scmp.ne.s32.totalorder %s108, %s109
      %p121 = scmp.eq.s32.totalorder %s19, 3
      %p122 = por %p120, %p121
      %p124 = scmp.ne.s32.totalorder %s109, %s123
      %p125 = scmp.eq.s32.totalorder %s19, 0
      %p126 = por %p124, %p125
      %s128 = sadd.s32 %s127, 1
      %p131 = scmp.eq.s32.totalorder %s13, 3
      %p132 = scmp.ne.s32.totalorder %s127, %s129
      %p133 = scmp.eq.s32.totalorder %s13, 0
      %p134 = por %p132, %p133
      %p135 = scmp.ne.s32.totalorder %s127, %s129
      %p136 = scmp.eq.s32.totalorder %s18, 3
      %p137 = por %p135, %p136
      %p138 = scmp.ne.s32.totalorder %s129, %s130
      %p139 = scmp.eq.s32.totalorder %s18, 0
      %p140 = por %p138, %p139
      %p141 = scmp.ne.s32.totalorder %s129, %s130
      %p142 = scmp.eq.s32.totalorder %s19, 3
      %p143 = por %p141, %p142
      %p145 = scmp.ne.s32.totalorder %s130, %s144
      %p146 = scmp.eq.s32.totalorder %s19, 0
      %p147 = por %p145, %p146
      %s148 = ssub.s32 %s21, %s28
      %p149 = scmp.eq.s32.totalorder %s148, 0
      %s151 = sadd.s32 %s150, 1
      %s152 = scalar_select %p149, %s150, %s151
      %p155 = pneg %p149
      %p156 = scmp.eq.s32.totalorder %s13, 3
      %p157 = por %p155, %p156
      %p158 = scmp.ne.s32.totalorder %s150, %s153
      %p159 = scmp.eq.s32.totalorder %s13, 0
      %p160 = por %p158, %p159
      %p161 = scmp.ne.s32.totalorder %s150, %s153
      %p162 = scmp.eq.s32.totalorder %s18, 3
      %p163 = por %p161, %p162
      %p164 = scmp.ne.s32.totalorder %s153, %s154
      %p165 = scmp.eq.s32.totalorder %s18, 0
      %p166 = por %p164, %p165
      %p167 = scmp.ne.s32.totalorder %s153, %s154
      %p168 = scmp.eq.s32.totalorder %s19, 3
      %p169 = por %p167, %p168
      %p171 = scmp.ne.s32.totalorder %s154, %s170
      %p172 = scmp.eq.s32.totalorder %s19, 0
      %p173 = por %p171, %p172
      %s174 = ssub.s32 %s20, %s32
      %p175 = scmp.eq.s32.totalorder %s174, 0
      %s177 = sadd.s32 %s176, 1
      %s178 = scalar_select %p175, %s176, %s177
      %p181 = pneg %p175
      %p182 = scmp.eq.s32.totalorder %s13, 3
      %p183 = por %p181, %p182
      %p184 = scmp.ne.s32.totalorder %s176, %s179
      %p185 = scmp.eq.s32.totalorder %s13, 0
      %p186 = por %p184, %p185
      %p187 = scmp.ne.s32.totalorder %s176, %s179
      %p188 = scmp.eq.s32.totalorder %s18, 3
      %p189 = por %p187, %p188
      %p190 = scmp.ne.s32.totalorder %s179, %s180
      %p191 = scmp.eq.s32.totalorder %s18, 0
      %p192 = por %p190, %p191
      %p193 = scmp.ne.s32.totalorder %s179, %s180
      %p194 = scmp.eq.s32.totalorder %s19, 3
      %p195 = por %p193, %p194
      %p197 = scmp.ne.s32.totalorder %s180, %s196
      %p198 = scmp.eq.s32.totalorder %s19, 0
      %p199 = por %p197, %p198
      %p200 = scmp.le.s32.totalorder 1, %s13
      %p201 = scmp.lt.s32.totalorder %s13, 5
      %p202 = pnand %p200, %p201
      %p203 = pneg %p202
      // Predicated region
      $region9: #{gcnii_ppi_forward.1} parent=5 // pred_check
        _
      $region10: #{gcnii_ppi_forward.1} parent=5 // pred_check_branch
        %205 = sbr.rel (%p202) target = $region12
      $region11: #{gcnii_ppi_forward.1} parent=5 // pred_region
        %s206 = ssub.s32 %s13, 1
        // Predicated region
        $region13: #{gcnii_ppi_forward.1} parent=11 // pred_check
          %p207 = pneg %p46
        $region14: #{gcnii_ppi_forward.1} parent=11 // pred_check_branch
          %209 = sbr.rel (%p207) target = $region16
        $region15: #{gcnii_ppi_forward.1} parent=11 // pred_region
          %211 = vsyncadd [#allocation4], 0
          %s213 = sshll.u32 %s0, 4
          %s214 = int_to_ptr.vmem [resolvable:$true] %s213
          %216 = dma.vmem_to_smem %s214, 16, [#allocation3], [#allocation4]
        $region16: #{gcnii_ppi_forward.1} parent=11 // pred_fallthru
          _
        // Predicated region
        $region17: #{gcnii_ppi_forward.1} parent=11 // pred_check
          %p217 = pneg %p119
        $region18: #{gcnii_ppi_forward.1} parent=11 // pred_check_branch
          %219 = sbr.rel (%p217) target = $region20
        $region19: #{gcnii_ppi_forward.1} parent=11 // pred_region
          _
        $region20: #{gcnii_ppi_forward.1} parent=11 // pred_fallthru
          _
        // Predicated region
        $region21: #{gcnii_ppi_forward.1} parent=11 // pred_check
          %p220 = pneg %p140
        $region22: #{gcnii_ppi_forward.1} parent=11 // pred_check_branch
          %222 = sbr.rel (%p220) target = $region24
        $region23: #{gcnii_ppi_forward.1} parent=11 // pred_region
          _
        $region24: #{gcnii_ppi_forward.1} parent=11 // pred_fallthru
          _
      $region12: #{gcnii_ppi_forward.1} parent=5 // pred_fallthru
        _
      %p223 = scmp.lt.s32.totalorder %s13, 4
      // Predicated region
      $region25: #{gcnii_ppi_forward.1} parent=5 // pred_check
        %p224 = pneg %p223
      $region26: #{gcnii_ppi_forward.1} parent=5 // pred_check_branch
        %226 = sbr.rel (%p224) target = $region28
      $region27: #{gcnii_ppi_forward.1} parent=5 // pred_region
        // Predicated region
        $region29: #{gcnii_ppi_forward.1} parent=27 // pred_check
          %p227 = pneg %p66
        $region30: #{gcnii_ppi_forward.1} parent=27 // pred_check_branch
          %229 = sbr.rel (%p227) target = $region32
        $region31: #{gcnii_ppi_forward.1} parent=27 // pred_region
          %p230 = scmp.lt.s32.totalorder %s20, 1
          %s231 = scalar_select %p230, %s20, 1
          %s232 = smul.addr %s231, 32
          %s233 = smul.addr %s232, 4
          %s234 = scalar_lea.vmem %s1, %s233
        $region32: #{gcnii_ppi_forward.1} parent=27 // pred_fallthru
          _
        // Predicated region
        $region33: #{gcnii_ppi_forward.1} parent=27 // pred_check
          %p235 = pneg %p92
        $region34: #{gcnii_ppi_forward.1} parent=27 // pred_check_branch
          %237 = sbr.rel (%p235) target = $region36
        $region35: #{gcnii_ppi_forward.1} parent=27 // pred_region
          %p238 = scmp.lt.s32.totalorder %s20, 1
          %s239 = scalar_select %p238, %s20, 1
          %s240 = smul.addr %s239, 64
          %s241 = smul.addr %s240, 4
          %s242 = scalar_lea.vmem %s2, %s241
        $region36: #{gcnii_ppi_forward.1} parent=27 // pred_fallthru
          _
        // Predicated region
        $region37: #{gcnii_ppi_forward.1} parent=27 // pred_check
          %p243 = pneg %p160
        $region38: #{gcnii_ppi_forward.1} parent=27 // pred_check_branch
          %245 = sbr.rel (%p243) target = $region40
        $region39: #{gcnii_ppi_forward.1} parent=27 // pred_region
          %p246 = scmp.lt.s32.totalorder %s21, 1
          %s247 = scalar_select %p246, %s21, 1
          %s248 = smul.addr %s247, 16
          %s249 = smul.addr %s248, 4
          %s250 = scalar_lea.vmem %s5, %s249
        $region40: #{gcnii_ppi_forward.1} parent=27 // pred_fallthru
          _
      $region28: #{gcnii_ppi_forward.1} parent=5 // pred_fallthru
        _
      %p251 = scmp.le.s32.totalorder 1, %s13
      %p252 = scmp.lt.s32.totalorder %s13, 5
      %p253 = pnand %p251, %p252
      %p254 = pneg %p253
      // Predicated region
      $region41: #{gcnii_ppi_forward.1} parent=5 // pred_check
        _
      $region42: #{gcnii_ppi_forward.1} parent=5 // pred_check_branch
        %256 = sbr.rel (%p253) target = $region44
      $region43: #{gcnii_ppi_forward.1} parent=5 // pred_region
        %s257 = ssub.s32 %s13, 1
        // Predicated region
        $region45: #{gcnii_ppi_forward.1} parent=43 // pred_check
          %p258 = pneg %p46
        $region46: #{gcnii_ppi_forward.1} parent=43 // pred_check_branch
          %260 = sbr.rel (%p258) target = $region48
        $region47: #{gcnii_ppi_forward.1} parent=43 // pred_region
          %262 = dma.done [#allocation4], 16
        $region48: #{gcnii_ppi_forward.1} parent=43 // pred_fallthru
          _
        %263 = sfence
        %p264 = pneg %p46
        %p265 = pneg %p43
        %p266 = scmp.lt.s32.totalorder %s22, 1
        %s267 = scalar_select %p266, %s22, 1
        %s268 = smul.addr %s267, 32
        %s269 = smul.addr %s268, 4
        %s270 = scalar_lea.vmem %s1, %s269
        %p271 = pneg %p72
        %p272 = pneg %p69
        %p273 = scmp.lt.s32.totalorder %s22, 1
        %s274 = scalar_select %p273, %s22, 1
        %s275 = smul.addr %s274, 64
        %s276 = smul.addr %s275, 4
        %s277 = scalar_lea.vmem %s2, %s276
        %p278 = pneg %p98
        %p279 = pneg %p95
        %p280 = pneg %p119
        %p281 = pneg %p116
        %p282 = pneg %p140
        %p283 = pneg %p137
        %p284 = scmp.lt.s32.totalorder %s23, 1
        %s285 = scalar_select %p284, %s23, 1
        %s286 = smul.addr %s285, 16
        %s287 = smul.addr %s286, 4
        %s288 = scalar_lea.vmem %s5, %s287
        %p289 = pneg %p166
        %p290 = pneg %p163
        %p291 = pneg %p192
        %p292 = pneg %p189
        %p293 = scmp.lt.s32.totalorder %s22, 1
        %s294 = scalar_select %p293, %s22, 1
        %s295 = smul.addr %s294, 32
        %s296 = smul.addr %s295, 8
        %s297 = scalar_lea.vmem %s6, %s296
        %p298 = scmp.lt.s32.totalorder %s22, 1
        %s299 = scalar_select %p298, %s22, 1
        %s300 = smul.addr %s299, 32
        %s301 = smul.addr %s300, 4
        %s302 = scalar_lea.vmem %s1, %s301
        %p303 = scmp.lt.s32.totalorder %s22, 1
        %s304 = scalar_select %p303, %s22, 1
        %s305 = smul.addr %s304, 64
        %s306 = smul.addr %s305, 4
        %s307 = scalar_lea.vmem %s2, %s306
        %p308 = scmp.lt.s32.totalorder %s23, 1
        %s309 = scalar_select %p308, %s23, 1
        %s310 = smul.addr %s309, 16
        %s311 = smul.addr %s310, 4
        %s312 = scalar_lea.vmem %s5, %s311
        %p313 = scmp.lt.s32.totalorder %s22, 1
        %s314 = scalar_select %p313, %s22, 1
        %s315 = smul.addr %s314, 32
        %s316 = smul.addr %s315, 8
        %s317 = scalar_lea.vmem %s6, %s316
        %p319 = scmp.eq.s32.totalorder %s23, 0
        // Predicated region
        $region49: #{gcnii_ppi_forward.1} parent=43 // pred_check
          %p320 = pneg %p319
        $region50: #{gcnii_ppi_forward.1} parent=43 // pred_check_branch
          %322 = sbr.rel (%p320) target = $region52
        $region51: #{gcnii_ppi_forward.1} parent=43 // pred_region
          %v323 = vld [vmem:[%s302] sm:$0xf]
          %v324 = vld [vmem:[%s302 + $0x4] sm:$0xf]
          %v325 = vld [vmem:[%s302 + $0x8] sm:$0xf]
          %v326 = vld [vmem:[%s302 + $0xc] sm:$0xf]
          %v327 = vld [vmem:[%s302 + $0x10] sm:$0xf]
          %v328 = vld [vmem:[%s302 + $0x14] sm:$0xf]
          %v329 = vld [vmem:[%s302 + $0x18] sm:$0xf]
          %v330 = vld [vmem:[%s302 + $0x1c] sm:$0xf]
          %v331 = vld [vmem:[%s302 + $0x20] sm:$0xf]
          %v332 = vld [vmem:[%s302 + $0x24] sm:$0xf]
          %v333 = vld [vmem:[%s302 + $0x28] sm:$0xf]
          %v334 = vld [vmem:[%s302 + $0x2c] sm:$0xf]
          %v335 = vld [vmem:[%s302 + $0x30] sm:$0xf]
          %v336 = vld [vmem:[%s302 + $0x34] sm:$0xf]
          %v337 = vld [vmem:[%s302 + $0x38] sm:$0xf]
          %v338 = vld [vmem:[%s302 + $0x3c] sm:$0xf]
          %v339 = vld [vmem:[%s302 + $0x40] sm:$0xf]
          %v340 = vld [vmem:[%s302 + $0x44] sm:$0xf]
          %v341 = vld [vmem:[%s302 + $0x48] sm:$0xf]
          %v342 = vld [vmem:[%s302 + $0x4c] sm:$0xf]
          %v343 = vld [vmem:[%s302 + $0x50] sm:$0xf]
          %v344 = vld [vmem:[%s302 + $0x54] sm:$0xf]
          %v345 = vld [vmem:[%s302 + $0x58] sm:$0xf]
          %v346 = vld [vmem:[%s302 + $0x5c] sm:$0xf]
          %v347 = vld [vmem:[%s302 + $0x60] sm:$0xf]
          %v348 = vld [vmem:[%s302 + $0x64] sm:$0xf]
          %v349 = vld [vmem:[%s302 + $0x68] sm:$0xf]
          %v350 = vld [vmem:[%s302 + $0x6c] sm:$0xf]
          %v351 = vld [vmem:[%s302 + $0x70] sm:$0xf]
          %v352 = vld [vmem:[%s302 + $0x74] sm:$0xf]
          %v353 = vld [vmem:[%s302 + $0x78] sm:$0xf]
          %v354 = vld [vmem:[%s302 + $0x7c] sm:$0xf]
          %v355 = vld [vmem:[%s3] sm:$0xf]
          %v356 = vld [vmem:[%s3 + $0x4] sm:$0xf]
          %v357 = vld [vmem:[%s3 + $0x8] sm:$0xf]
          %v358 = vld [vmem:[%s3 + $0xc] sm:$0xf]
          %v359 = vld [vmem:[%s3 + $0x10] sm:$0xf]
          %v360 = vld [vmem:[%s3 + $0x14] sm:$0xf]
          %v361 = vld [vmem:[%s3 + $0x18] sm:$0xf]
          %v362 = vld [vmem:[%s3 + $0x1c] sm:$0xf]
          %v363 = vld [vmem:[%s4] sm:$0x1]
          %v365 = vperm.slane %v363, 0
          %v399 = vunpack.c.l.b16 %v323
          %v400 = vunpack.c.l.b16 %v324
          %v401 = vunpack.c.l.b16 %v325
          %v402 = vunpack.c.l.b16 %v326
          %v403 = vunpack.c.l.b16 %v327
          %v404 = vunpack.c.l.b16 %v328
          %v405 = vunpack.c.l.b16 %v329
          %v406 = vunpack.c.l.b16 %v330
          %v407 = vunpack.c.l.b16 %v331
          %v408 = vunpack.c.l.b16 %v332
          %v409 = vunpack.c.l.b16 %v333
          %v410 = vunpack.c.l.b16 %v334
          %v411 = vunpack.c.l.b16 %v335
          %v412 = vunpack.c.l.b16 %v336
          %v413 = vunpack.c.l.b16 %v337
          %v414 = vunpack.c.l.b16 %v338
          %v415 = vunpack.c.l.b16 %v339
          %v416 = vunpack.c.l.b16 %v340
          %v417 = vunpack.c.l.b16 %v341
          %v418 = vunpack.c.l.b16 %v342
          %v419 = vunpack.c.l.b16 %v343
          %v420 = vunpack.c.l.b16 %v344
          %v421 = vunpack.c.l.b16 %v345
          %v422 = vunpack.c.l.b16 %v346
          %v423 = vunpack.c.l.b16 %v347
          %v424 = vunpack.c.l.b16 %v348
          %v425 = vunpack.c.l.b16 %v349
          %v426 = vunpack.c.l.b16 %v350
          %v427 = vunpack.c.l.b16 %v351
          %v428 = vunpack.c.l.b16 %v352
          %v429 = vunpack.c.l.b16 %v353
          %v430 = vunpack.c.l.b16 %v354
          %v431 = vpack.c.b16 %v400, %v399
          %v432 = vpack.c.b16 %v402, %v401
          %v433 = vpack.c.b16 %v404, %v403
          %v434 = vpack.c.b16 %v406, %v405
          %v435 = vpack.c.b16 %v408, %v407
          %v436 = vpack.c.b16 %v410, %v409
          %v437 = vpack.c.b16 %v412, %v411
          %v438 = vpack.c.b16 %v414, %v413
          %v439 = vpack.c.b16 %v416, %v415
          %v440 = vpack.c.b16 %v418, %v417
          %v441 = vpack.c.b16 %v420, %v419
          %v442 = vpack.c.b16 %v422, %v421
          %v443 = vpack.c.b16 %v424, %v423
          %v444 = vpack.c.b16 %v426, %v425
          %v445 = vpack.c.b16 %v428, %v427
          %v446 = vpack.c.b16 %v430, %v429
          %v455 = vunpack.c.l.b16 %v355
          %v456 = vunpack.c.l.b16 %v356
          %v457 = vunpack.c.l.b16 %v357
          %v458 = vunpack.c.l.b16 %v358
          %v459 = vunpack.c.l.b16 %v359
          %v460 = vunpack.c.l.b16 %v360
          %v461 = vunpack.c.l.b16 %v361
          %v462 = vunpack.c.l.b16 %v362
          %v463 = vpack.c.b16 %v456, %v455
          %v464 = vpack.c.b16 %v458, %v457
          %v465 = vpack.c.b16 %v460, %v459
          %v466 = vpack.c.b16 %v462, %v461
          %vm471 = vcmask 523264
          %v473 = vsel %vm471, %v431, 0
          %v476 = vsel %vm471, %v432, 0
          %v479 = vsel %vm471, %v433, 0
          %v482 = vsel %vm471, %v434, 0
          %v485 = vsel %vm471, %v435, 0
          %v488 = vsel %vm471, %v436, 0
          %v491 = vsel %vm471, %v437, 0
          %v494 = vsel %vm471, %v438, 0
          %v497 = vsel %vm471, %v439, 0
          %v500 = vsel %vm471, %v440, 0
          %v503 = vsel %vm471, %v441, 0
          %v506 = vsel %vm471, %v442, 0
          %v509 = vsel %vm471, %v443, 0
          %v512 = vsel %vm471, %v444, 0
          %v515 = vsel %vm471, %v445, 0
          %v518 = vsel %vm471, %v446, 0
          %520 = vmatpush.bf16.msra.mxu0 0
          %521 = vmatpush.bf16.msra.mxu0 0
          %522 = vmatpush.bf16.msra.mxu0 0
          %523 = vmatpush.bf16.msra.mxu0 0
          %524 = vmatpush.bf16.msra.mxu0 %v466
          %525 = vmatpush.bf16.msra.mxu0 %v465
          %526 = vmatpush.bf16.msra.mxu0 %v464
          %527 = vmatpush.bf16.msra.mxu0 %v463
          %528 = vmatmul.bf16.gmra.mxu0 %v473
          %v529 = vpop.f32.mrf.mxu0
          %v530 = vadd.f32 %v365, %v529
          %v531 = vpop.f32.mrf.mxu0
          %v532 = vadd.f32 %v365, %v531
          %533 = vmatmul.bf16.gmra.mxu0 %v476
          %v534 = vpop.f32.mrf.mxu0
          %v535 = vadd.f32 %v365, %v534
          %v536 = vpop.f32.mrf.mxu0
          %v537 = vadd.f32 %v365, %v536
          %538 = vmatmul.bf16.gmra.mxu0 %v479
          %v539 = vpop.f32.mrf.mxu0
          %v540 = vadd.f32 %v365, %v539
          %v541 = vpop.f32.mrf.mxu0
          %v542 = vadd.f32 %v365, %v541
          %543 = vmatmul.bf16.gmra.mxu0 %v482
          %v544 = vpop.f32.mrf.mxu0
          %v545 = vadd.f32 %v365, %v544
          %v546 = vpop.f32.mrf.mxu0
          %v547 = vadd.f32 %v365, %v546
          %548 = vmatmul.bf16.gmra.mxu0 %v485
          %v549 = vpop.f32.mrf.mxu0
          %v550 = vadd.f32 %v365, %v549
          %v551 = vpop.f32.mrf.mxu0
          %v552 = vadd.f32 %v365, %v551
          %553 = vmatmul.bf16.gmra.mxu0 %v488
          %v554 = vpop.f32.mrf.mxu0
          %v555 = vadd.f32 %v365, %v554
          %v556 = vpop.f32.mrf.mxu0
          %v557 = vadd.f32 %v365, %v556
          %558 = vmatmul.bf16.gmra.mxu0 %v491
          %v559 = vpop.f32.mrf.mxu0
          %v560 = vadd.f32 %v365, %v559
          %v561 = vpop.f32.mrf.mxu0
          %v562 = vadd.f32 %v365, %v561
          %563 = vmatmul.bf16.gmra.mxu0 %v494
          %v564 = vpop.f32.mrf.mxu0
          %v565 = vadd.f32 %v365, %v564
          %v566 = vpop.f32.mrf.mxu0
          %v567 = vadd.f32 %v365, %v566
          %568 = vmatmul.bf16.gmra.mxu0 %v497
          %v569 = vpop.f32.mrf.mxu0
          %v570 = vadd.f32 %v365, %v569
          %v571 = vpop.f32.mrf.mxu0
          %v572 = vadd.f32 %v365, %v571
          %573 = vmatmul.bf16.gmra.mxu0 %v500
          %v574 = vpop.f32.mrf.mxu0
          %v575 = vadd.f32 %v365, %v574
          %v576 = vpop.f32.mrf.mxu0
          %v577 = vadd.f32 %v365, %v576
          %578 = vmatmul.bf16.gmra.mxu0 %v503
          %v579 = vpop.f32.mrf.mxu0
          %v580 = vadd.f32 %v365, %v579
          %v581 = vpop.f32.mrf.mxu0
          %v582 = vadd.f32 %v365, %v581
          %583 = vmatmul.bf16.gmra.mxu0 %v506
          %v584 = vpop.f32.mrf.mxu0
          %v585 = vadd.f32 %v365, %v584
          %v586 = vpop.f32.mrf.mxu0
          %v587 = vadd.f32 %v365, %v586
          %588 = vmatmul.bf16.gmra.mxu0 %v509
          %v589 = vpop.f32.mrf.mxu0
          %v590 = vadd.f32 %v365, %v589
          %v591 = vpop.f32.mrf.mxu0
          %v592 = vadd.f32 %v365, %v591
          %593 = vmatmul.bf16.gmra.mxu0 %v512
          %v594 = vpop.f32.mrf.mxu0
          %v595 = vadd.f32 %v365, %v594
          %v596 = vpop.f32.mrf.mxu0
          %v597 = vadd.f32 %v365, %v596
          %598 = vmatmul.bf16.gmra.mxu0 %v515
          %v599 = vpop.f32.mrf.mxu0
          %v600 = vadd.f32 %v365, %v599
          %v601 = vpop.f32.mrf.mxu0
          %v602 = vadd.f32 %v365, %v601
          %603 = vmatmul.bf16.gmra.mxu0 %v518
          %v604 = vpop.f32.mrf.mxu0
          %v605 = vadd.f32 %v365, %v604
          %v606 = vpop.f32.mrf.mxu0
          %v607 = vadd.f32 %v365, %v606
          %608 = vdwg.mxu0
          %v609 = vmax.f32 %v530, 0.0
          %v610 = vmax.f32 %v532, 0.0
          %v611 = vmax.f32 %v535, 0.0
          %v612 = vmax.f32 %v537, 0.0
          %v613 = vmax.f32 %v540, 0.0
          %v614 = vmax.f32 %v542, 0.0
          %v615 = vmax.f32 %v545, 0.0
          %v616 = vmax.f32 %v547, 0.0
          %v617 = vmax.f32 %v550, 0.0
          %v618 = vmax.f32 %v552, 0.0
          %v619 = vmax.f32 %v555, 0.0
          %v620 = vmax.f32 %v557, 0.0
          %v621 = vmax.f32 %v560, 0.0
          %v622 = vmax.f32 %v562, 0.0
          %v623 = vmax.f32 %v565, 0.0
          %v624 = vmax.f32 %v567, 0.0
          %v625 = vmax.f32 %v570, 0.0
          %v626 = vmax.f32 %v572, 0.0
          %v627 = vmax.f32 %v575, 0.0
          %v628 = vmax.f32 %v577, 0.0
          %v629 = vmax.f32 %v580, 0.0
          %v630 = vmax.f32 %v582, 0.0
          %v631 = vmax.f32 %v585, 0.0
          %v632 = vmax.f32 %v587, 0.0
          %v633 = vmax.f32 %v590, 0.0
          %v634 = vmax.f32 %v592, 0.0
          %v635 = vmax.f32 %v595, 0.0
          %v636 = vmax.f32 %v597, 0.0
          %v637 = vmax.f32 %v600, 0.0
          %v638 = vmax.f32 %v602, 0.0
          %v639 = vmax.f32 %v605, 0.0
          %v640 = vmax.f32 %v607, 0.0
          %641 = vst [vmem:[#allocation2] sm:$0xff] %v609
          %642 = vst [vmem:[#allocation2 + $0x8] sm:$0xff] %v610
          %643 = vst [vmem:[#allocation2 + $0x10] sm:$0xff] %v611
          %644 = vst [vmem:[#allocation2 + $0x18] sm:$0xff] %v612
          %645 = vst [vmem:[#allocation2 + $0x20] sm:$0xff] %v613
          %646 = vst [vmem:[#allocation2 + $0x28] sm:$0xff] %v614
          %647 = vst [vmem:[#allocation2 + $0x30] sm:$0xff] %v615
          %648 = vst [vmem:[#allocation2 + $0x38] sm:$0xff] %v616
          %649 = vst [vmem:[#allocation2 + $0x40] sm:$0xff] %v617
          %650 = vst [vmem:[#allocation2 + $0x48] sm:$0xff] %v618
          %651 = vst [vmem:[#allocation2 + $0x50] sm:$0xff] %v619
          %652 = vst [vmem:[#allocation2 + $0x58] sm:$0xff] %v620
          %653 = vst [vmem:[#allocation2 + $0x60] sm:$0xff] %v621
          %654 = vst [vmem:[#allocation2 + $0x68] sm:$0xff] %v622
          %655 = vst [vmem:[#allocation2 + $0x70] sm:$0xff] %v623
          %656 = vst [vmem:[#allocation2 + $0x78] sm:$0xff] %v624
          %657 = vst [vmem:[#allocation2 + $0x80] sm:$0xff] %v625
          %658 = vst [vmem:[#allocation2 + $0x88] sm:$0xff] %v626
          %659 = vst [vmem:[#allocation2 + $0x90] sm:$0xff] %v627
          %660 = vst [vmem:[#allocation2 + $0x98] sm:$0xff] %v628
          %661 = vst [vmem:[#allocation2 + $0xa0] sm:$0xff] %v629
          %662 = vst [vmem:[#allocation2 + $0xa8] sm:$0xff] %v630
          %663 = vst [vmem:[#allocation2 + $0xb0] sm:$0xff] %v631
          %664 = vst [vmem:[#allocation2 + $0xb8] sm:$0xff] %v632
          %665 = vst [vmem:[#allocation2 + $0xc0] sm:$0xff] %v633
          %666 = vst [vmem:[#allocation2 + $0xc8] sm:$0xff] %v634
          %667 = vst [vmem:[#allocation2 + $0xd0] sm:$0xff] %v635
          %668 = vst [vmem:[#allocation2 + $0xd8] sm:$0xff] %v636
          %669 = vst [vmem:[#allocation2 + $0xe0] sm:$0xff] %v637
          %670 = vst [vmem:[#allocation2 + $0xe8] sm:$0xff] %v638
          %671 = vst [vmem:[#allocation2 + $0xf0] sm:$0xff] %v639
          %672 = vst [vmem:[#allocation2 + $0xf8] sm:$0xff] %v640
          %673 = vst [vmem:[%s317] sm:$0xff] %v609
          %674 = vst [vmem:[%s317 + $0x8] sm:$0xff] %v610
          %675 = vst [vmem:[%s317 + $0x10] sm:$0xff] %v611
          %676 = vst [vmem:[%s317 + $0x18] sm:$0xff] %v612
          %677 = vst [vmem:[%s317 + $0x20] sm:$0xff] %v613
          %678 = vst [vmem:[%s317 + $0x28] sm:$0xff] %v614
          %679 = vst [vmem:[%s317 + $0x30] sm:$0xff] %v615
          %680 = vst [vmem:[%s317 + $0x38] sm:$0xff] %v616
          %681 = vst [vmem:[%s317 + $0x40] sm:$0xff] %v617
          %682 = vst [vmem:[%s317 + $0x48] sm:$0xff] %v618
          %683 = vst [vmem:[%s317 + $0x50] sm:$0xff] %v619
          %684 = vst [vmem:[%s317 + $0x58] sm:$0xff] %v620
          %685 = vst [vmem:[%s317 + $0x60] sm:$0xff] %v621
          %686 = vst [vmem:[%s317 + $0x68] sm:$0xff] %v622
          %687 = vst [vmem:[%s317 + $0x70] sm:$0xff] %v623
          %688 = vst [vmem:[%s317 + $0x78] sm:$0xff] %v624
          %689 = vst [vmem:[%s317 + $0x80] sm:$0xff] %v625
          %690 = vst [vmem:[%s317 + $0x88] sm:$0xff] %v626
          %691 = vst [vmem:[%s317 + $0x90] sm:$0xff] %v627
          %692 = vst [vmem:[%s317 + $0x98] sm:$0xff] %v628
          %693 = vst [vmem:[%s317 + $0xa0] sm:$0xff] %v629
          %694 = vst [vmem:[%s317 + $0xa8] sm:$0xff] %v630
          %695 = vst [vmem:[%s317 + $0xb0] sm:$0xff] %v631
          %696 = vst [vmem:[%s317 + $0xb8] sm:$0xff] %v632
          %697 = vst [vmem:[%s317 + $0xc0] sm:$0xff] %v633
          %698 = vst [vmem:[%s317 + $0xc8] sm:$0xff] %v634
          %699 = vst [vmem:[%s317 + $0xd0] sm:$0xff] %v635
          %700 = vst [vmem:[%s317 + $0xd8] sm:$0xff] %v636
          %701 = vst [vmem:[%s317 + $0xe0] sm:$0xff] %v637
          %702 = vst [vmem:[%s317 + $0xe8] sm:$0xff] %v638
          %703 = vst [vmem:[%s317 + $0xf0] sm:$0xff] %v639
          %704 = vst [vmem:[%s317 + $0xf8] sm:$0xff] %v640
        $region52: #{gcnii_ppi_forward.1} parent=43 // pred_fallthru
          _
        %s705 = smul.u32 %s23, 2
        %s706 = sld [smem:[#allocation3 + %s705]]
        %s707 = sadd.s32 %s705, 1
        %s708 = sld [smem:[#allocation3 + %s707]]
        %v709 = vld [vmem:[%s317] sm:$0xff]
        %v710 = vld [vmem:[%s317 + $0x8] sm:$0xff]
        %v711 = vld [vmem:[%s317 + $0x10] sm:$0xff]
        %v712 = vld [vmem:[%s317 + $0x18] sm:$0xff]
        %v713 = vld [vmem:[%s317 + $0x20] sm:$0xff]
        %v714 = vld [vmem:[%s317 + $0x28] sm:$0xff]
        %v715 = vld [vmem:[%s317 + $0x30] sm:$0xff]
        %v716 = vld [vmem:[%s317 + $0x38] sm:$0xff]
        %v717 = vld [vmem:[%s317 + $0x40] sm:$0xff]
        %v718 = vld [vmem:[%s317 + $0x48] sm:$0xff]
        %v719 = vld [vmem:[%s317 + $0x50] sm:$0xff]
        %v720 = vld [vmem:[%s317 + $0x58] sm:$0xff]
        %v721 = vld [vmem:[%s317 + $0x60] sm:$0xff]
        %v722 = vld [vmem:[%s317 + $0x68] sm:$0xff]
        %v723 = vld [vmem:[%s317 + $0x70] sm:$0xff]
        %v724 = vld [vmem:[%s317 + $0x78] sm:$0xff]
        %v725 = vld [vmem:[%s317 + $0x80] sm:$0xff]
        %v726 = vld [vmem:[%s317 + $0x88] sm:$0xff]
        %v727 = vld [vmem:[%s317 + $0x90] sm:$0xff]
        %v728 = vld [vmem:[%s317 + $0x98] sm:$0xff]
        %v729 = vld [vmem:[%s317 + $0xa0] sm:$0xff]
        %v730 = vld [vmem:[%s317 + $0xa8] sm:$0xff]
        %v731 = vld [vmem:[%s317 + $0xb0] sm:$0xff]
        %v732 = vld [vmem:[%s317 + $0xb8] sm:$0xff]
        %v733 = vld [vmem:[%s317 + $0xc0] sm:$0xff]
        %v734 = vld [vmem:[%s317 + $0xc8] sm:$0xff]
        %v735 = vld [vmem:[%s317 + $0xd0] sm:$0xff]
        %v736 = vld [vmem:[%s317 + $0xd8] sm:$0xff]
        %v737 = vld [vmem:[%s317 + $0xe0] sm:$0xff]
        %v738 = vld [vmem:[%s317 + $0xe8] sm:$0xff]
        %v739 = vld [vmem:[%s317 + $0xf0] sm:$0xff]
        %v740 = vld [vmem:[%s317 + $0xf8] sm:$0xff]
        %v741 = vld [vmem:[#allocation2] sm:$0xff]
        %v742 = vld [vmem:[#allocation2 + $0x8] sm:$0xff]
        %v743 = vld [vmem:[#allocation2 + $0x10] sm:$0xff]
        %v744 = vld [vmem:[#allocation2 + $0x18] sm:$0xff]
        %v745 = vld [vmem:[#allocation2 + $0x20] sm:$0xff]
        %v746 = vld [vmem:[#allocation2 + $0x28] sm:$0xff]
        %v747 = vld [vmem:[#allocation2 + $0x30] sm:$0xff]
        %v748 = vld [vmem:[#allocation2 + $0x38] sm:$0xff]
        %v749 = vld [vmem:[#allocation2 + $0x40] sm:$0xff]
        %v750 = vld [vmem:[#allocation2 + $0x48] sm:$0xff]
        %v751 = vld [vmem:[#allocation2 + $0x50] sm:$0xff]
        %v752 = vld [vmem:[#allocation2 + $0x58] sm:$0xff]
        %v753 = vld [vmem:[#allocation2 + $0x60] sm:$0xff]
        %v754 = vld [vmem:[#allocation2 + $0x68] sm:$0xff]
        %v755 = vld [vmem:[#allocation2 + $0x70] sm:$0xff]
        %v756 = vld [vmem:[#allocation2 + $0x78] sm:$0xff]
        %v757 = vld [vmem:[#allocation2 + $0x80] sm:$0xff]
        %v758 = vld [vmem:[#allocation2 + $0x88] sm:$0xff]
        %v759 = vld [vmem:[#allocation2 + $0x90] sm:$0xff]
        %v760 = vld [vmem:[#allocation2 + $0x98] sm:$0xff]
        %v761 = vld [vmem:[#allocation2 + $0xa0] sm:$0xff]
        %v762 = vld [vmem:[#allocation2 + $0xa8] sm:$0xff]
        %v763 = vld [vmem:[#allocation2 + $0xb0] sm:$0xff]
        %v764 = vld [vmem:[#allocation2 + $0xb8] sm:$0xff]
        %v765 = vld [vmem:[#allocation2 + $0xc0] sm:$0xff]
        %v766 = vld [vmem:[#allocation2 + $0xc8] sm:$0xff]
        %v767 = vld [vmem:[#allocation2 + $0xd0] sm:$0xff]
        %v768 = vld [vmem:[#allocation2 + $0xd8] sm:$0xff]
        %v769 = vld [vmem:[#allocation2 + $0xe0] sm:$0xff]
        %v770 = vld [vmem:[#allocation2 + $0xe8] sm:$0xff]
        %v771 = vld [vmem:[#allocation2 + $0xf0] sm:$0xff]
        %v772 = vld [vmem:[#allocation2 + $0xf8] sm:$0xff]
        %v773 = vld [vmem:[%s307] sm:$0xff]
        %v774 = vld [vmem:[%s307 + $0x8] sm:$0xff]
        %v775 = vld [vmem:[%s307 + $0x10] sm:$0xff]
        %v776 = vld [vmem:[%s307 + $0x18] sm:$0xff]
        %v777 = vld [vmem:[%s307 + $0x20] sm:$0xff]
        %v778 = vld [vmem:[%s307 + $0x28] sm:$0xff]
        %v779 = vld [vmem:[%s307 + $0x30] sm:$0xff]
        %v780 = vld [vmem:[%s307 + $0x38] sm:$0xff]
        %v781 = vld [vmem:[%s307 + $0x40] sm:$0xff]
        %v782 = vld [vmem:[%s307 + $0x48] sm:$0xff]
        %v783 = vld [vmem:[%s307 + $0x50] sm:$0xff]
        %v784 = vld [vmem:[%s307 + $0x58] sm:$0xff]
        %v785 = vld [vmem:[%s307 + $0x60] sm:$0xff]
        %v786 = vld [vmem:[%s307 + $0x68] sm:$0xff]
        %v787 = vld [vmem:[%s307 + $0x70] sm:$0xff]
        %v788 = vld [vmem:[%s307 + $0x78] sm:$0xff]
        %v789 = vld [vmem:[%s307 + $0x80] sm:$0xff]
        %v790 = vld [vmem:[%s307 + $0x88] sm:$0xff]
        %v791 = vld [vmem:[%s307 + $0x90] sm:$0xff]
        %v792 = vld [vmem:[%s307 + $0x98] sm:$0xff]
        %v793 = vld [vmem:[%s307 + $0xa0] sm:$0xff]
        %v794 = vld [vmem:[%s307 + $0xa8] sm:$0xff]
        %v795 = vld [vmem:[%s307 + $0xb0] sm:$0xff]
        %v796 = vld [vmem:[%s307 + $0xb8] sm:$0xff]
        %v797 = vld [vmem:[%s307 + $0xc0] sm:$0xff]
        %v798 = vld [vmem:[%s307 + $0xc8] sm:$0xff]
        %v799 = vld [vmem:[%s307 + $0xd0] sm:$0xff]
        %v800 = vld [vmem:[%s307 + $0xd8] sm:$0xff]
        %v801 = vld [vmem:[%s307 + $0xe0] sm:$0xff]
        %v802 = vld [vmem:[%s307 + $0xe8] sm:$0xff]
        %v803 = vld [vmem:[%s307 + $0xf0] sm:$0xff]
        %v804 = vld [vmem:[%s307 + $0xf8] sm:$0xff]
        %v805 = vpack.c.bf16 %v710, %v709
        %v806 = vpack.c.bf16 %v712, %v711
        %v807 = vpack.c.bf16 %v714, %v713
        %v808 = vpack.c.bf16 %v716, %v715
        %v809 = vpack.c.bf16 %v718, %v717
        %v810 = vpack.c.bf16 %v720, %v719
        %v811 = vpack.c.bf16 %v722, %v721
        %v812 = vpack.c.bf16 %v724, %v723
        %v813 = vpack.c.bf16 %v726, %v725
        %v814 = vpack.c.bf16 %v728, %v727
        %v815 = vpack.c.bf16 %v730, %v729
        %v816 = vpack.c.bf16 %v732, %v731
        %v817 = vpack.c.bf16 %v734, %v733
        %v818 = vpack.c.bf16 %v736, %v735
        %v819 = vpack.c.bf16 %v738, %v737
        %v820 = vpack.c.bf16 %v740, %v739
        %v853 = vunpack.c.l.b16 %v773
        %v854 = vunpack.c.h.b16 %v773
        %v855 = vunpack.c.l.b16 %v774
        %v856 = vunpack.c.h.b16 %v774
        %v857 = vunpack.c.l.b16 %v775
        %v858 = vunpack.c.h.b16 %v775
        %v859 = vunpack.c.l.b16 %v776
        %v860 = vunpack.c.h.b16 %v776
        %v861 = vunpack.c.l.b16 %v777
        %v862 = vunpack.c.h.b16 %v777
        %v863 = vunpack.c.l.b16 %v778
        %v864 = vunpack.c.h.b16 %v778
        %v865 = vunpack.c.l.b16 %v779
        %v866 = vunpack.c.h.b16 %v779
        %v867 = vunpack.c.l.b16 %v780
        %v868 = vunpack.c.h.b16 %v780
        %v869 = vunpack.c.l.b16 %v781
        %v870 = vunpack.c.h.b16 %v781
        %v871 = vunpack.c.l.b16 %v782
        %v872 = vunpack.c.h.b16 %v782
        %v873 = vunpack.c.l.b16 %v783
        %v874 = vunpack.c.h.b16 %v783
        %v875 = vunpack.c.l.b16 %v784
        %v876 = vunpack.c.h.b16 %v784
        %v877 = vunpack.c.l.b16 %v785
        %v878 = vunpack.c.h.b16 %v785
        %v879 = vunpack.c.l.b16 %v786
        %v880 = vunpack.c.h.b16 %v786
        %v881 = vunpack.c.l.b16 %v787
        %v882 = vunpack.c.h.b16 %v787
        %v883 = vunpack.c.l.b16 %v788
        %v884 = vunpack.c.h.b16 %v788
        %v885 = vunpack.c.l.b16 %v789
        %v886 = vunpack.c.h.b16 %v789
        %v887 = vunpack.c.l.b16 %v790
        %v888 = vunpack.c.h.b16 %v790
        %v889 = vunpack.c.l.b16 %v791
        %v890 = vunpack.c.h.b16 %v791
        %v891 = vunpack.c.l.b16 %v792
        %v892 = vunpack.c.h.b16 %v792
        %v893 = vunpack.c.l.b16 %v793
        %v894 = vunpack.c.h.b16 %v793
        %v895 = vunpack.c.l.b16 %v794
        %v896 = vunpack.c.h.b16 %v794
        %v897 = vunpack.c.l.b16 %v795
        %v898 = vunpack.c.h.b16 %v795
        %v899 = vunpack.c.l.b16 %v796
        %v900 = vunpack.c.h.b16 %v796
        %v901 = vunpack.c.l.b16 %v797
        %v902 = vunpack.c.h.b16 %v797
        %v903 = vunpack.c.l.b16 %v798
        %v904 = vunpack.c.h.b16 %v798
        %v905 = vunpack.c.l.b16 %v799
        %v906 = vunpack.c.h.b16 %v799
        %v907 = vunpack.c.l.b16 %v800
        %v908 = vunpack.c.h.b16 %v800
        %v909 = vunpack.c.l.b16 %v801
        %v910 = vunpack.c.h.b16 %v801
        %v911 = vunpack.c.l.b16 %v802
        %v912 = vunpack.c.h.b16 %v802
        %v913 = vunpack.c.l.b16 %v803
        %v914 = vunpack.c.h.b16 %v803
        %v915 = vunpack.c.l.b16 %v804
        %v916 = vunpack.c.h.b16 %v804
        %v917 = vpack.c.b16 %v855, %v853
        %v918 = vpack.c.b16 %v856, %v854
        %v919 = vpack.c.b16 %v859, %v857
        %v920 = vpack.c.b16 %v860, %v858
        %v921 = vpack.c.b16 %v863, %v861
        %v922 = vpack.c.b16 %v864, %v862
        %v923 = vpack.c.b16 %v867, %v865
        %v924 = vpack.c.b16 %v868, %v866
        %v925 = vpack.c.b16 %v871, %v869
        %v926 = vpack.c.b16 %v872, %v870
        %v927 = vpack.c.b16 %v875, %v873
        %v928 = vpack.c.b16 %v876, %v874
        %v929 = vpack.c.b16 %v879, %v877
        %v930 = vpack.c.b16 %v880, %v878
        %v931 = vpack.c.b16 %v883, %v881
        %v932 = vpack.c.b16 %v884, %v882
        %v933 = vpack.c.b16 %v887, %v885
        %v934 = vpack.c.b16 %v888, %v886
        %v935 = vpack.c.b16 %v891, %v889
        %v936 = vpack.c.b16 %v892, %v890
        %v937 = vpack.c.b16 %v895, %v893
        %v938 = vpack.c.b16 %v896, %v894
        %v939 = vpack.c.b16 %v899, %v897
        %v940 = vpack.c.b16 %v900, %v898
        %v941 = vpack.c.b16 %v903, %v901
        %v942 = vpack.c.b16 %v904, %v902
        %v943 = vpack.c.b16 %v907, %v905
        %v944 = vpack.c.b16 %v908, %v906
        %v945 = vpack.c.b16 %v911, %v909
        %v946 = vpack.c.b16 %v912, %v910
        %v947 = vpack.c.b16 %v915, %v913
        %v948 = vpack.c.b16 %v916, %v914
        %981 = vmatpush.bf16.msra.mxu0 %v812
        %982 = vmatpush.bf16.msra.mxu0 %v811
        %983 = vmatpush.bf16.msra.mxu0 %v810
        %984 = vmatpush.bf16.msra.mxu0 %v809
        %985 = vmatpush.bf16.msra.mxu0 %v808
        %986 = vmatpush.bf16.msra.mxu0 %v807
        %987 = vmatpush.bf16.msra.mxu0 %v806
        %988 = vmatpush.bf16.msra.mxu0 %v805
        %989 = vmatmul.bf16.gmra.mxu0 %v917
        %v990 = vpop.f32.mrf.mxu0
        %v991 = vadd.f32 0.0, %v990
        %v992 = vpop.f32.mrf.mxu0
        %v993 = vadd.f32 0.0, %v992
        %994 = vmatmul.bf16.gmra.mxu0 %v919
        %v995 = vpop.f32.mrf.mxu0
        %v996 = vadd.f32 0.0, %v995
        %v997 = vpop.f32.mrf.mxu0
        %v998 = vadd.f32 0.0, %v997
        %999 = vmatmul.bf16.gmra.mxu0 %v921
        %v1000 = vpop.f32.mrf.mxu0
        %v1001 = vadd.f32 0.0, %v1000
        %v1002 = vpop.f32.mrf.mxu0
        %v1003 = vadd.f32 0.0, %v1002
        %1004 = vmatmul.bf16.gmra.mxu0 %v923
        %v1005 = vpop.f32.mrf.mxu0
        %v1006 = vadd.f32 0.0, %v1005
        %v1007 = vpop.f32.mrf.mxu0
        %v1008 = vadd.f32 0.0, %v1007
        %1009 = vmatmul.bf16.gmra.mxu0 %v925
        %v1010 = vpop.f32.mrf.mxu0
        %v1011 = vadd.f32 0.0, %v1010
        %v1012 = vpop.f32.mrf.mxu0
        %v1013 = vadd.f32 0.0, %v1012
        %1014 = vmatmul.bf16.gmra.mxu0 %v927
        %v1015 = vpop.f32.mrf.mxu0
        %v1016 = vadd.f32 0.0, %v1015
        %v1017 = vpop.f32.mrf.mxu0
        %v1018 = vadd.f32 0.0, %v1017
        %1019 = vmatmul.bf16.gmra.mxu0 %v929
        %v1020 = vpop.f32.mrf.mxu0
        %v1021 = vadd.f32 0.0, %v1020
        %v1022 = vpop.f32.mrf.mxu0
        %v1023 = vadd.f32 0.0, %v1022
        %1024 = vmatmul.bf16.gmra.mxu0 %v931
        %v1025 = vpop.f32.mrf.mxu0
        %v1026 = vadd.f32 0.0, %v1025
        %v1027 = vpop.f32.mrf.mxu0
        %v1028 = vadd.f32 0.0, %v1027
        %1029 = vmatmul.bf16.gmra.mxu0 %v933
        %v1030 = vpop.f32.mrf.mxu0
        %v1031 = vadd.f32 0.0, %v1030
        %v1032 = vpop.f32.mrf.mxu0
        %v1033 = vadd.f32 0.0, %v1032
        %1034 = vmatmul.bf16.gmra.mxu0 %v935
        %v1035 = vpop.f32.mrf.mxu0
        %v1036 = vadd.f32 0.0, %v1035
        %v1037 = vpop.f32.mrf.mxu0
        %v1038 = vadd.f32 0.0, %v1037
        %1039 = vmatmul.bf16.gmra.mxu0 %v937
        %v1040 = vpop.f32.mrf.mxu0
        %v1041 = vadd.f32 0.0, %v1040
        %v1042 = vpop.f32.mrf.mxu0
        %v1043 = vadd.f32 0.0, %v1042
        %1044 = vmatmul.bf16.gmra.mxu0 %v939
        %v1045 = vpop.f32.mrf.mxu0
        %v1046 = vadd.f32 0.0, %v1045
        %v1047 = vpop.f32.mrf.mxu0
        %v1048 = vadd.f32 0.0, %v1047
        %1049 = vmatmul.bf16.gmra.mxu0 %v941
        %v1050 = vpop.f32.mrf.mxu0
        %v1051 = vadd.f32 0.0, %v1050
        %v1052 = vpop.f32.mrf.mxu0
        %v1053 = vadd.f32 0.0, %v1052
        %1054 = vmatmul.bf16.gmra.mxu0 %v943
        %v1055 = vpop.f32.mrf.mxu0
        %v1056 = vadd.f32 0.0, %v1055
        %v1057 = vpop.f32.mrf.mxu0
        %v1058 = vadd.f32 0.0, %v1057
        %1059 = vmatmul.bf16.gmra.mxu0 %v945
        %v1060 = vpop.f32.mrf.mxu0
        %v1061 = vadd.f32 0.0, %v1060
        %v1062 = vpop.f32.mrf.mxu0
        %v1063 = vadd.f32 0.0, %v1062
        %1064 = vmatmul.bf16.gmra.mxu0 %v947
        %v1065 = vpop.f32.mrf.mxu0
        %v1066 = vadd.f32 0.0, %v1065
        %v1067 = vpop.f32.mrf.mxu0
        %v1068 = vadd.f32 0.0, %v1067
        %1069 = vdwg.mxu0
        %1070 = vmatpush.bf16.msra.mxu0 %v820
        %1071 = vmatpush.bf16.msra.mxu0 %v819
        %1072 = vmatpush.bf16.msra.mxu0 %v818
        %1073 = vmatpush.bf16.msra.mxu0 %v817
        %1074 = vmatpush.bf16.msra.mxu0 %v816
        %1075 = vmatpush.bf16.msra.mxu0 %v815
        %1076 = vmatpush.bf16.msra.mxu0 %v814
        %1077 = vmatpush.bf16.msra.mxu0 %v813
        %1078 = vmatmul.bf16.gmra.mxu0 %v918
        %v1079 = vpop.f32.mrf.mxu0
        %v1080 = vadd.f32 %v991, %v1079
        %v1081 = vpop.f32.mrf.mxu0
        %v1082 = vadd.f32 %v993, %v1081
        %1083 = vmatmul.bf16.gmra.mxu0 %v920
        %v1084 = vpop.f32.mrf.mxu0
        %v1085 = vadd.f32 %v996, %v1084
        %v1086 = vpop.f32.mrf.mxu0
        %v1087 = vadd.f32 %v998, %v1086
        %1088 = vmatmul.bf16.gmra.mxu0 %v922
        %v1089 = vpop.f32.mrf.mxu0
        %v1090 = vadd.f32 %v1001, %v1089
        %v1091 = vpop.f32.mrf.mxu0
        %v1092 = vadd.f32 %v1003, %v1091
        %1093 = vmatmul.bf16.gmra.mxu0 %v924
        %v1094 = vpop.f32.mrf.mxu0
        %v1095 = vadd.f32 %v1006, %v1094
        %v1096 = vpop.f32.mrf.mxu0
        %v1097 = vadd.f32 %v1008, %v1096
        %1098 = vmatmul.bf16.gmra.mxu0 %v926
        %v1099 = vpop.f32.mrf.mxu0
        %v1100 = vadd.f32 %v1011, %v1099
        %v1101 = vpop.f32.mrf.mxu0
        %v1102 = vadd.f32 %v1013, %v1101
        %1103 = vmatmul.bf16.gmra.mxu0 %v928
        %v1104 = vpop.f32.mrf.mxu0
        %v1105 = vadd.f32 %v1016, %v1104
        %v1106 = vpop.f32.mrf.mxu0
        %v1107 = vadd.f32 %v1018, %v1106
        %1108 = vmatmul.bf16.gmra.mxu0 %v930
        %v1109 = vpop.f32.mrf.mxu0
        %v1110 = vadd.f32 %v1021, %v1109
        %v1111 = vpop.f32.mrf.mxu0
        %v1112 = vadd.f32 %v1023, %v1111
        %1113 = vmatmul.bf16.gmra.mxu0 %v932
        %v1114 = vpop.f32.mrf.mxu0
        %v1115 = vadd.f32 %v1026, %v1114
        %v1116 = vpop.f32.mrf.mxu0
        %v1117 = vadd.f32 %v1028, %v1116
        %1118 = vmatmul.bf16.gmra.mxu0 %v934
        %v1119 = vpop.f32.mrf.mxu0
        %v1120 = vadd.f32 %v1031, %v1119
        %v1121 = vpop.f32.mrf.mxu0
        %v1122 = vadd.f32 %v1033, %v1121
        %1123 = vmatmul.bf16.gmra.mxu0 %v936
        %v1124 = vpop.f32.mrf.mxu0
        %v1125 = vadd.f32 %v1036, %v1124
        %v1126 = vpop.f32.mrf.mxu0
        %v1127 = vadd.f32 %v1038, %v1126
        %1128 = vmatmul.bf16.gmra.mxu0 %v938
        %v1129 = vpop.f32.mrf.mxu0
        %v1130 = vadd.f32 %v1041, %v1129
        %v1131 = vpop.f32.mrf.mxu0
        %v1132 = vadd.f32 %v1043, %v1131
        %1133 = vmatmul.bf16.gmra.mxu0 %v940
        %v1134 = vpop.f32.mrf.mxu0
        %v1135 = vadd.f32 %v1046, %v1134
        %v1136 = vpop.f32.mrf.mxu0
        %v1137 = vadd.f32 %v1048, %v1136
        %1138 = vmatmul.bf16.gmra.mxu0 %v942
        %v1139 = vpop.f32.mrf.mxu0
        %v1140 = vadd.f32 %v1051, %v1139
        %v1141 = vpop.f32.mrf.mxu0
        %v1142 = vadd.f32 %v1053, %v1141
        %1143 = vmatmul.bf16.gmra.mxu0 %v944
        %v1144 = vpop.f32.mrf.mxu0
        %v1145 = vadd.f32 %v1056, %v1144
        %v1146 = vpop.f32.mrf.mxu0
        %v1147 = vadd.f32 %v1058, %v1146
        %1148 = vmatmul.bf16.gmra.mxu0 %v946
        %v1149 = vpop.f32.mrf.mxu0
        %v1150 = vadd.f32 %v1061, %v1149
        %v1151 = vpop.f32.mrf.mxu0
        %v1152 = vadd.f32 %v1063, %v1151
        %1153 = vmatmul.bf16.gmra.mxu0 %v948
        %v1154 = vpop.f32.mrf.mxu0
        %v1155 = vadd.f32 %v1066, %v1154
        %v1156 = vpop.f32.mrf.mxu0
        %v1157 = vadd.f32 %v1068, %v1156
        %1158 = vdwg.mxu0
        %v1159 = vld [vmem:[%s312] sm:$0xf]
        %v1160 = vld [vmem:[%s312 + $0x4] sm:$0xf]
        %v1161 = vld [vmem:[%s312 + $0x8] sm:$0xf]
        %v1162 = vld [vmem:[%s312 + $0xc] sm:$0xf]
        %v1163 = vld [vmem:[%s312 + $0x10] sm:$0xf]
        %v1164 = vld [vmem:[%s312 + $0x14] sm:$0xf]
        %v1165 = vld [vmem:[%s312 + $0x18] sm:$0xf]
        %v1166 = vld [vmem:[%s312 + $0x1c] sm:$0xf]
        %v1167 = vld [vmem:[%s312 + $0x20] sm:$0xf]
        %v1168 = vld [vmem:[%s312 + $0x24] sm:$0xf]
        %v1169 = vld [vmem:[%s312 + $0x28] sm:$0xf]
        %v1170 = vld [vmem:[%s312 + $0x2c] sm:$0xf]
        %v1171 = vld [vmem:[%s312 + $0x30] sm:$0xf]
        %v1172 = vld [vmem:[%s312 + $0x34] sm:$0xf]
        %v1173 = vld [vmem:[%s312 + $0x38] sm:$0xf]
        %v1174 = vld [vmem:[%s312 + $0x3c] sm:$0xf]
        %s1175 = ssub.f32 1.0, %s708
        %v1176 = vstv %s1175
        %v1177 = vmul.f32 %v1176, %v1080
        %v1178 = vmul.f32 %v1176, %v1082
        %v1179 = vmul.f32 %v1176, %v1085
        %v1180 = vmul.f32 %v1176, %v1087
        %v1181 = vmul.f32 %v1176, %v1090
        %v1182 = vmul.f32 %v1176, %v1092
        %v1183 = vmul.f32 %v1176, %v1095
        %v1184 = vmul.f32 %v1176, %v1097
        %v1185 = vmul.f32 %v1176, %v1100
        %v1186 = vmul.f32 %v1176, %v1102
        %v1187 = vmul.f32 %v1176, %v1105
        %v1188 = vmul.f32 %v1176, %v1107
        %v1189 = vmul.f32 %v1176, %v1110
        %v1190 = vmul.f32 %v1176, %v1112
        %v1191 = vmul.f32 %v1176, %v1115
        %v1192 = vmul.f32 %v1176, %v1117
        %v1193 = vmul.f32 %v1176, %v1120
        %v1194 = vmul.f32 %v1176, %v1122
        %v1195 = vmul.f32 %v1176, %v1125
        %v1196 = vmul.f32 %v1176, %v1127
        %v1197 = vmul.f32 %v1176, %v1130
        %v1198 = vmul.f32 %v1176, %v1132
        %v1199 = vmul.f32 %v1176, %v1135
        %v1200 = vmul.f32 %v1176, %v1137
        %v1201 = vmul.f32 %v1176, %v1140
        %v1202 = vmul.f32 %v1176, %v1142
        %v1203 = vmul.f32 %v1176, %v1145
        %v1204 = vmul.f32 %v1176, %v1147
        %v1205 = vmul.f32 %v1176, %v1150
        %v1206 = vmul.f32 %v1176, %v1152
        %v1207 = vmul.f32 %v1176, %v1155
        %v1208 = vmul.f32 %v1176, %v1157
        %v1209 = vstv %s708
        %v1210 = vmul.f32 %v1209, %v741
        %v1211 = vmul.f32 %v1209, %v742
        %v1212 = vmul.f32 %v1209, %v743
        %v1213 = vmul.f32 %v1209, %v744
        %v1214 = vmul.f32 %v1209, %v745
        %v1215 = vmul.f32 %v1209, %v746
        %v1216 = vmul.f32 %v1209, %v747
        %v1217 = vmul.f32 %v1209, %v748
        %v1218 = vmul.f32 %v1209, %v749
        %v1219 = vmul.f32 %v1209, %v750
        %v1220 = vmul.f32 %v1209, %v751
        %v1221 = vmul.f32 %v1209, %v752
        %v1222 = vmul.f32 %v1209, %v753
        %v1223 = vmul.f32 %v1209, %v754
        %v1224 = vmul.f32 %v1209, %v755
        %v1225 = vmul.f32 %v1209, %v756
        %v1226 = vmul.f32 %v1209, %v757
        %v1227 = vmul.f32 %v1209, %v758
        %v1228 = vmul.f32 %v1209, %v759
        %v1229 = vmul.f32 %v1209, %v760
        %v1230 = vmul.f32 %v1209, %v761
        %v1231 = vmul.f32 %v1209, %v762
        %v1232 = vmul.f32 %v1209, %v763
        %v1233 = vmul.f32 %v1209, %v764
        %v1234 = vmul.f32 %v1209, %v765
        %v1235 = vmul.f32 %v1209, %v766
        %v1236 = vmul.f32 %v1209, %v767
        %v1237 = vmul.f32 %v1209, %v768
        %v1238 = vmul.f32 %v1209, %v769
        %v1239 = vmul.f32 %v1209, %v770
        %v1240 = vmul.f32 %v1209, %v771
        %v1241 = vmul.f32 %v1209, %v772
        %v1242 = vadd.f32 %v1177, %v1210
        %v1243 = vadd.f32 %v1178, %v1211
        %v1244 = vadd.f32 %v1179, %v1212
        %v1245 = vadd.f32 %v1180, %v1213
        %v1246 = vadd.f32 %v1181, %v1214
        %v1247 = vadd.f32 %v1182, %v1215
        %v1248 = vadd.f32 %v1183, %v1216
        %v1249 = vadd.f32 %v1184, %v1217
        %v1250 = vadd.f32 %v1185, %v1218
        %v1251 = vadd.f32 %v1186, %v1219
        %v1252 = vadd.f32 %v1187, %v1220
        %v1253 = vadd.f32 %v1188, %v1221
        %v1254 = vadd.f32 %v1189, %v1222
        %v1255 = vadd.f32 %v1190, %v1223
        %v1256 = vadd.f32 %v1191, %v1224
        %v1257 = vadd.f32 %v1192, %v1225
        %v1258 = vadd.f32 %v1193, %v1226
        %v1259 = vadd.f32 %v1194, %v1227
        %v1260 = vadd.f32 %v1195, %v1228
        %v1261 = vadd.f32 %v1196, %v1229
        %v1262 = vadd.f32 %v1197, %v1230
        %v1263 = vadd.f32 %v1198, %v1231
        %v1264 = vadd.f32 %v1199, %v1232
        %v1265 = vadd.f32 %v1200, %v1233
        %v1266 = vadd.f32 %v1201, %v1234
        %v1267 = vadd.f32 %v1202, %v1235
        %v1268 = vadd.f32 %v1203, %v1236
        %v1269 = vadd.f32 %v1204, %v1237
        %v1270 = vadd.f32 %v1205, %v1238
        %v1271 = vadd.f32 %v1206, %v1239
        %v1272 = vadd.f32 %v1207, %v1240
        %v1273 = vadd.f32 %v1208, %v1241
        %v1274 = vpack.c.bf16 %v1243, %v1242
        %v1275 = vpack.c.bf16 %v1245, %v1244
        %v1276 = vpack.c.bf16 %v1247, %v1246
        %v1277 = vpack.c.bf16 %v1249, %v1248
        %v1278 = vpack.c.bf16 %v1251, %v1250
        %v1279 = vpack.c.bf16 %v1253, %v1252
        %v1280 = vpack.c.bf16 %v1255, %v1254
        %v1281 = vpack.c.bf16 %v1257, %v1256
        %v1282 = vpack.c.bf16 %v1259, %v1258
        %v1283 = vpack.c.bf16 %v1261, %v1260
        %v1284 = vpack.c.bf16 %v1263, %v1262
        %v1285 = vpack.c.bf16 %v1265, %v1264
        %v1286 = vpack.c.bf16 %v1267, %v1266
        %v1287 = vpack.c.bf16 %v1269, %v1268
        %v1288 = vpack.c.bf16 %v1271, %v1270
        %v1289 = vpack.c.bf16 %v1273, %v1272
        %v1306 = vunpack.c.l.b16 %v1159
        %v1307 = vunpack.c.l.b16 %v1160
        %v1308 = vunpack.c.l.b16 %v1161
        %v1309 = vunpack.c.l.b16 %v1162
        %v1310 = vunpack.c.l.b16 %v1163
        %v1311 = vunpack.c.l.b16 %v1164
        %v1312 = vunpack.c.l.b16 %v1165
        %v1313 = vunpack.c.l.b16 %v1166
        %v1314 = vunpack.c.l.b16 %v1167
        %v1315 = vunpack.c.l.b16 %v1168
        %v1316 = vunpack.c.l.b16 %v1169
        %v1317 = vunpack.c.l.b16 %v1170
        %v1318 = vunpack.c.l.b16 %v1171
        %v1319 = vunpack.c.l.b16 %v1172
        %v1320 = vunpack.c.l.b16 %v1173
        %v1321 = vunpack.c.l.b16 %v1174
        %v1322 = vpack.c.b16 %v1307, %v1306
        %v1323 = vpack.c.b16 %v1309, %v1308
        %v1324 = vpack.c.b16 %v1311, %v1310
        %v1325 = vpack.c.b16 %v1313, %v1312
        %v1326 = vpack.c.b16 %v1315, %v1314
        %v1327 = vpack.c.b16 %v1317, %v1316
        %v1328 = vpack.c.b16 %v1319, %v1318
        %v1329 = vpack.c.b16 %v1321, %v1320
        %1338 = vmatpush.bf16.msra.mxu0 %v1329
        %1339 = vmatpush.bf16.msra.mxu0 %v1328
        %1340 = vmatpush.bf16.msra.mxu0 %v1327
        %1341 = vmatpush.bf16.msra.mxu0 %v1326
        %1342 = vmatpush.bf16.msra.mxu0 %v1325
        %1343 = vmatpush.bf16.msra.mxu0 %v1324
        %1344 = vmatpush.bf16.msra.mxu0 %v1323
        %1345 = vmatpush.bf16.msra.mxu0 %v1322
        %1346 = vmatmul.bf16.gmra.mxu0 %v1274
        %v1347 = vpop.f32.mrf.mxu0
        %v1348 = vadd.f32 0.0, %v1347
        %v1349 = vpop.f32.mrf.mxu0
        %v1350 = vadd.f32 0.0, %v1349
        %1351 = vmatmul.bf16.gmra.mxu0 %v1275
        %v1352 = vpop.f32.mrf.mxu0
        %v1353 = vadd.f32 0.0, %v1352
        %v1354 = vpop.f32.mrf.mxu0
        %v1355 = vadd.f32 0.0, %v1354
        %1356 = vmatmul.bf16.gmra.mxu0 %v1276
        %v1357 = vpop.f32.mrf.mxu0
        %v1358 = vadd.f32 0.0, %v1357
        %v1359 = vpop.f32.mrf.mxu0
        %v1360 = vadd.f32 0.0, %v1359
        %1361 = vmatmul.bf16.gmra.mxu0 %v1277
        %v1362 = vpop.f32.mrf.mxu0
        %v1363 = vadd.f32 0.0, %v1362
        %v1364 = vpop.f32.mrf.mxu0
        %v1365 = vadd.f32 0.0, %v1364
        %1366 = vmatmul.bf16.gmra.mxu0 %v1278
        %v1367 = vpop.f32.mrf.mxu0
        %v1368 = vadd.f32 0.0, %v1367
        %v1369 = vpop.f32.mrf.mxu0
        %v1370 = vadd.f32 0.0, %v1369
        %1371 = vmatmul.bf16.gmra.mxu0 %v1279
        %v1372 = vpop.f32.mrf.mxu0
        %v1373 = vadd.f32 0.0, %v1372
        %v1374 = vpop.f32.mrf.mxu0
        %v1375 = vadd.f32 0.0, %v1374
        %1376 = vmatmul.bf16.gmra.mxu0 %v1280
        %v1377 = vpop.f32.mrf.mxu0
        %v1378 = vadd.f32 0.0, %v1377
        %v1379 = vpop.f32.mrf.mxu0
        %v1380 = vadd.f32 0.0, %v1379
        %1381 = vmatmul.bf16.gmra.mxu0 %v1281
        %v1382 = vpop.f32.mrf.mxu0
        %v1383 = vadd.f32 0.0, %v1382
        %v1384 = vpop.f32.mrf.mxu0
        %v1385 = vadd.f32 0.0, %v1384
        %1386 = vmatmul.bf16.gmra.mxu0 %v1282
        %v1387 = vpop.f32.mrf.mxu0
        %v1388 = vadd.f32 0.0, %v1387
        %v1389 = vpop.f32.mrf.mxu0
        %v1390 = vadd.f32 0.0, %v1389
        %1391 = vmatmul.bf16.gmra.mxu0 %v1283
        %v1392 = vpop.f32.mrf.mxu0
        %v1393 = vadd.f32 0.0, %v1392
        %v1394 = vpop.f32.mrf.mxu0
        %v1395 = vadd.f32 0.0, %v1394
        %1396 = vmatmul.bf16.gmra.mxu0 %v1284
        %v1397 = vpop.f32.mrf.mxu0
        %v1398 = vadd.f32 0.0, %v1397
        %v1399 = vpop.f32.mrf.mxu0
        %v1400 = vadd.f32 0.0, %v1399
        %1401 = vmatmul.bf16.gmra.mxu0 %v1285
        %v1402 = vpop.f32.mrf.mxu0
        %v1403 = vadd.f32 0.0, %v1402
        %v1404 = vpop.f32.mrf.mxu0
        %v1405 = vadd.f32 0.0, %v1404
        %1406 = vmatmul.bf16.gmra.mxu0 %v1286
        %v1407 = vpop.f32.mrf.mxu0
        %v1408 = vadd.f32 0.0, %v1407
        %v1409 = vpop.f32.mrf.mxu0
        %v1410 = vadd.f32 0.0, %v1409
        %1411 = vmatmul.bf16.gmra.mxu0 %v1287
        %v1412 = vpop.f32.mrf.mxu0
        %v1413 = vadd.f32 0.0, %v1412
        %v1414 = vpop.f32.mrf.mxu0
        %v1415 = vadd.f32 0.0, %v1414
        %1416 = vmatmul.bf16.gmra.mxu0 %v1288
        %v1417 = vpop.f32.mrf.mxu0
        %v1418 = vadd.f32 0.0, %v1417
        %v1419 = vpop.f32.mrf.mxu0
        %v1420 = vadd.f32 0.0, %v1419
        %1421 = vmatmul.bf16.gmra.mxu0 %v1289
        %v1422 = vpop.f32.mrf.mxu0
        %v1423 = vadd.f32 0.0, %v1422
        %v1424 = vpop.f32.mrf.mxu0
        %v1425 = vadd.f32 0.0, %v1424
        %1426 = vdwg.mxu0
        %v1427 = vstv %s706
        %v1428 = vmul.f32 %v1427, %v1348
        %v1429 = vmul.f32 %v1427, %v1350
        %v1430 = vmul.f32 %v1427, %v1353
        %v1431 = vmul.f32 %v1427, %v1355
        %v1432 = vmul.f32 %v1427, %v1358
        %v1433 = vmul.f32 %v1427, %v1360
        %v1434 = vmul.f32 %v1427, %v1363
        %v1435 = vmul.f32 %v1427, %v1365
        %v1436 = vmul.f32 %v1427, %v1368
        %v1437 = vmul.f32 %v1427, %v1370
        %v1438 = vmul.f32 %v1427, %v1373
        %v1439 = vmul.f32 %v1427, %v1375
        %v1440 = vmul.f32 %v1427, %v1378
        %v1441 = vmul.f32 %v1427, %v1380
        %v1442 = vmul.f32 %v1427, %v1383
        %v1443 = vmul.f32 %v1427, %v1385
        %v1444 = vmul.f32 %v1427, %v1388
        %v1445 = vmul.f32 %v1427, %v1390
        %v1446 = vmul.f32 %v1427, %v1393
        %v1447 = vmul.f32 %v1427, %v1395
        %v1448 = vmul.f32 %v1427, %v1398
        %v1449 = vmul.f32 %v1427, %v1400
        %v1450 = vmul.f32 %v1427, %v1403
        %v1451 = vmul.f32 %v1427, %v1405
        %v1452 = vmul.f32 %v1427, %v1408
        %v1453 = vmul.f32 %v1427, %v1410
        %v1454 = vmul.f32 %v1427, %v1413
        %v1455 = vmul.f32 %v1427, %v1415
        %v1456 = vmul.f32 %v1427, %v1418
        %v1457 = vmul.f32 %v1427, %v1420
        %v1458 = vmul.f32 %v1427, %v1423
        %v1459 = vmul.f32 %v1427, %v1425
        %s1460 = ssub.f32 1.0, %s706
        %v1461 = vstv %s1460
        %v1462 = vmul.f32 %v1461, %v1242
        %v1463 = vmul.f32 %v1461, %v1243
        %v1464 = vmul.f32 %v1461, %v1244
        %v1465 = vmul.f32 %v1461, %v1245
        %v1466 = vmul.f32 %v1461, %v1246
        %v1467 = vmul.f32 %v1461, %v1247
        %v1468 = vmul.f32 %v1461, %v1248
        %v1469 = vmul.f32 %v1461, %v1249
        %v1470 = vmul.f32 %v1461, %v1250
        %v1471 = vmul.f32 %v1461, %v1251
        %v1472 = vmul.f32 %v1461, %v1252
        %v1473 = vmul.f32 %v1461, %v1253
        %v1474 = vmul.f32 %v1461, %v1254
        %v1475 = vmul.f32 %v1461, %v1255
        %v1476 = vmul.f32 %v1461, %v1256
        %v1477 = vmul.f32 %v1461, %v1257
        %v1478 = vmul.f32 %v1461, %v1258
        %v1479 = vmul.f32 %v1461, %v1259
        %v1480 = vmul.f32 %v1461, %v1260
        %v1481 = vmul.f32 %v1461, %v1261
        %v1482 = vmul.f32 %v1461, %v1262
        %v1483 = vmul.f32 %v1461, %v1263
        %v1484 = vmul.f32 %v1461, %v1264
        %v1485 = vmul.f32 %v1461, %v1265
        %v1486 = vmul.f32 %v1461, %v1266
        %v1487 = vmul.f32 %v1461, %v1267
        %v1488 = vmul.f32 %v1461, %v1268
        %v1489 = vmul.f32 %v1461, %v1269
        %v1490 = vmul.f32 %v1461, %v1270
        %v1491 = vmul.f32 %v1461, %v1271
        %v1492 = vmul.f32 %v1461, %v1272
        %v1493 = vmul.f32 %v1461, %v1273
        %v1494 = vadd.f32 %v1428, %v1462
        %v1495 = vadd.f32 %v1429, %v1463
        %v1496 = vadd.f32 %v1430, %v1464
        %v1497 = vadd.f32 %v1431, %v1465
        %v1498 = vadd.f32 %v1432, %v1466
        %v1499 = vadd.f32 %v1433, %v1467
        %v1500 = vadd.f32 %v1434, %v1468
        %v1501 = vadd.f32 %v1435, %v1469
        %v1502 = vadd.f32 %v1436, %v1470
        %v1503 = vadd.f32 %v1437, %v1471
        %v1504 = vadd.f32 %v1438, %v1472
        %v1505 = vadd.f32 %v1439, %v1473
        %v1506 = vadd.f32 %v1440, %v1474
        %v1507 = vadd.f32 %v1441, %v1475
        %v1508 = vadd.f32 %v1442, %v1476
        %v1509 = vadd.f32 %v1443, %v1477
        %v1510 = vadd.f32 %v1444, %v1478
        %v1511 = vadd.f32 %v1445, %v1479
        %v1512 = vadd.f32 %v1446, %v1480
        %v1513 = vadd.f32 %v1447, %v1481
        %v1514 = vadd.f32 %v1448, %v1482
        %v1515 = vadd.f32 %v1449, %v1483
        %v1516 = vadd.f32 %v1450, %v1484
        %v1517 = vadd.f32 %v1451, %v1485
        %v1518 = vadd.f32 %v1452, %v1486
        %v1519 = vadd.f32 %v1453, %v1487
        %v1520 = vadd.f32 %v1454, %v1488
        %v1521 = vadd.f32 %v1455, %v1489
        %v1522 = vadd.f32 %v1456, %v1490
        %v1523 = vadd.f32 %v1457, %v1491
        %v1524 = vadd.f32 %v1458, %v1492
        %v1525 = vadd.f32 %v1459, %v1493
        %v1526 = vadd.f32 %v1494, %v709
        %v1527 = vadd.f32 %v1495, %v710
        %v1528 = vadd.f32 %v1496, %v711
        %v1529 = vadd.f32 %v1497, %v712
        %v1530 = vadd.f32 %v1498, %v713
        %v1531 = vadd.f32 %v1499, %v714
        %v1532 = vadd.f32 %v1500, %v715
        %v1533 = vadd.f32 %v1501, %v716
        %v1534 = vadd.f32 %v1502, %v717
        %v1535 = vadd.f32 %v1503, %v718
        %v1536 = vadd.f32 %v1504, %v719
        %v1537 = vadd.f32 %v1505, %v720
        %v1538 = vadd.f32 %v1506, %v721
        %v1539 = vadd.f32 %v1507, %v722
        %v1540 = vadd.f32 %v1508, %v723
        %v1541 = vadd.f32 %v1509, %v724
        %v1542 = vadd.f32 %v1510, %v725
        %v1543 = vadd.f32 %v1511, %v726
        %v1544 = vadd.f32 %v1512, %v727
        %v1545 = vadd.f32 %v1513, %v728
        %v1546 = vadd.f32 %v1514, %v729
        %v1547 = vadd.f32 %v1515, %v730
        %v1548 = vadd.f32 %v1516, %v731
        %v1549 = vadd.f32 %v1517, %v732
        %v1550 = vadd.f32 %v1518, %v733
        %v1551 = vadd.f32 %v1519, %v734
        %v1552 = vadd.f32 %v1520, %v735
        %v1553 = vadd.f32 %v1521, %v736
        %v1554 = vadd.f32 %v1522, %v737
        %v1555 = vadd.f32 %v1523, %v738
        %v1556 = vadd.f32 %v1524, %v739
        %v1557 = vadd.f32 %v1525, %v740
        %v1558 = vmax.f32 %v1526, 0.0
        %v1559 = vmax.f32 %v1527, 0.0
        %v1560 = vmax.f32 %v1528, 0.0
        %v1561 = vmax.f32 %v1529, 0.0
        %v1562 = vmax.f32 %v1530, 0.0
        %v1563 = vmax.f32 %v1531, 0.0
        %v1564 = vmax.f32 %v1532, 0.0
        %v1565 = vmax.f32 %v1533, 0.0
        %v1566 = vmax.f32 %v1534, 0.0
        %v1567 = vmax.f32 %v1535, 0.0
        %v1568 = vmax.f32 %v1536, 0.0
        %v1569 = vmax.f32 %v1537, 0.0
        %v1570 = vmax.f32 %v1538, 0.0
        %v1571 = vmax.f32 %v1539, 0.0
        %v1572 = vmax.f32 %v1540, 0.0
        %v1573 = vmax.f32 %v1541, 0.0
        %v1574 = vmax.f32 %v1542, 0.0
        %v1575 = vmax.f32 %v1543, 0.0
        %v1576 = vmax.f32 %v1544, 0.0
        %v1577 = vmax.f32 %v1545, 0.0
        %v1578 = vmax.f32 %v1546, 0.0
        %v1579 = vmax.f32 %v1547, 0.0
        %v1580 = vmax.f32 %v1548, 0.0
        %v1581 = vmax.f32 %v1549, 0.0
        %v1582 = vmax.f32 %v1550, 0.0
        %v1583 = vmax.f32 %v1551, 0.0
        %v1584 = vmax.f32 %v1552, 0.0
        %v1585 = vmax.f32 %v1553, 0.0
        %v1586 = vmax.f32 %v1554, 0.0
        %v1587 = vmax.f32 %v1555, 0.0
        %v1588 = vmax.f32 %v1556, 0.0
        %v1589 = vmax.f32 %v1557, 0.0
        %1590 = vst [vmem:[%s317] sm:$0xff] %v1558
        %1591 = vst [vmem:[%s317 + $0x8] sm:$0xff] %v1559
        %1592 = vst [vmem:[%s317 + $0x10] sm:$0xff] %v1560
        %1593 = vst [vmem:[%s317 + $0x18] sm:$0xff] %v1561
        %1594 = vst [vmem:[%s317 + $0x20] sm:$0xff] %v1562
        %1595 = vst [vmem:[%s317 + $0x28] sm:$0xff] %v1563
        %1596 = vst [vmem:[%s317 + $0x30] sm:$0xff] %v1564
        %1597 = vst [vmem:[%s317 + $0x38] sm:$0xff] %v1565
        %1598 = vst [vmem:[%s317 + $0x40] sm:$0xff] %v1566
        %1599 = vst [vmem:[%s317 + $0x48] sm:$0xff] %v1567
        %1600 = vst [vmem:[%s317 + $0x50] sm:$0xff] %v1568
        %1601 = vst [vmem:[%s317 + $0x58] sm:$0xff] %v1569
        %1602 = vst [vmem:[%s317 + $0x60] sm:$0xff] %v1570
        %1603 = vst [vmem:[%s317 + $0x68] sm:$0xff] %v1571
        %1604 = vst [vmem:[%s317 + $0x70] sm:$0xff] %v1572
        %1605 = vst [vmem:[%s317 + $0x78] sm:$0xff] %v1573
        %1606 = vst [vmem:[%s317 + $0x80] sm:$0xff] %v1574
        %1607 = vst [vmem:[%s317 + $0x88] sm:$0xff] %v1575
        %1608 = vst [vmem:[%s317 + $0x90] sm:$0xff] %v1576
        %1609 = vst [vmem:[%s317 + $0x98] sm:$0xff] %v1577
        %1610 = vst [vmem:[%s317 + $0xa0] sm:$0xff] %v1578
        %1611 = vst [vmem:[%s317 + $0xa8] sm:$0xff] %v1579
        %1612 = vst [vmem:[%s317 + $0xb0] sm:$0xff] %v1580
        %1613 = vst [vmem:[%s317 + $0xb8] sm:$0xff] %v1581
        %1614 = vst [vmem:[%s317 + $0xc0] sm:$0xff] %v1582
        %1615 = vst [vmem:[%s317 + $0xc8] sm:$0xff] %v1583
        %1616 = vst [vmem:[%s317 + $0xd0] sm:$0xff] %v1584
        %1617 = vst [vmem:[%s317 + $0xd8] sm:$0xff] %v1585
        %1618 = vst [vmem:[%s317 + $0xe0] sm:$0xff] %v1586
        %1619 = vst [vmem:[%s317 + $0xe8] sm:$0xff] %v1587
        %1620 = vst [vmem:[%s317 + $0xf0] sm:$0xff] %v1588
        %1621 = vst [vmem:[%s317 + $0xf8] sm:$0xff] %v1589
        %p1622 = scmp.lt.s32.totalorder %s22, 1
        %s1623 = scalar_select %p1622, %s22, 1
        %s1624 = smul.addr %s1623, 32
        %s1625 = smul.addr %s1624, 8
        %s1626 = scalar_lea.vmem %s6, %s1625
        // Predicated region
        $region53: #{gcnii_ppi_forward.1} parent=43 // pred_check
          %p1627 = pneg %p189
        $region54: #{gcnii_ppi_forward.1} parent=43 // pred_check_branch
          %1629 = sbr.rel (%p1627) target = $region56
        $region55: #{gcnii_ppi_forward.1} parent=43 // pred_region
          _
        $region56: #{gcnii_ppi_forward.1} parent=43 // pred_fallthru
          _
      $region44: #{gcnii_ppi_forward.1} parent=5 // pred_fallthru
        _
      %p1630 = scmp.le.s32.totalorder 2, %s13
      // Predicated region
      $region57: #{gcnii_ppi_forward.1} parent=5 // pred_check
        %p1631 = pneg %p1630
      $region58: #{gcnii_ppi_forward.1} parent=5 // pred_check_branch
        %1633 = sbr.rel (%p1631) target = $region60
      $region59: #{gcnii_ppi_forward.1} parent=5 // pred_region
        %s1634 = ssub.s32 %s13, 2
        // Predicated region
        $region61: #{gcnii_ppi_forward.1} parent=59 // pred_check
          %p1635 = pneg %p195
        $region62: #{gcnii_ppi_forward.1} parent=59 // pred_check_branch
          %1637 = sbr.rel (%p1635) target = $region64
        $region63: #{gcnii_ppi_forward.1} parent=59 // pred_region
          %p1638 = scmp.lt.s32.totalorder %s24, 1
          %s1639 = scalar_select %p1638, %s24, 1
          %s1640 = smul.addr %s1639, 32
          %s1641 = smul.addr %s1640, 8
          %s1642 = scalar_lea.vmem %s6, %s1641
        $region64: #{gcnii_ppi_forward.1} parent=59 // pred_fallthru
          _
      $region60: #{gcnii_ppi_forward.1} parent=5 // pred_fallthru
        _
    $region6: #{gcnii_ppi_forward.1} parent=1 // loop_footer
      %s17 = sadd.s32 1, %s13
    $region7: #{gcnii_ppi_forward.1} parent=1 // loop_footer_branch
      %12 = sbr.rel target = $region3
    $region8: #{gcnii_ppi_forward.1} parent=1 // loop_exit
      _
    %1643 = vsyncpa [#allocation4], 1
    %s1644 = scalar_lea.sflag [#allocation4], 1
    %1645 = vsyncpa %s1644, 1

</llo_original>
